<compile_context>
chip_gen: v7x
topology: tpu7x:2x2x1
jax: 0.10.0
libtpu: 0.0.40
codegen_flags: <defaults>
</compile_context>

<pallas_src>
import jax
import jax.numpy as jnp
import numpy as np
from jax.experimental import pallas as pl
from jax.experimental.pallas import tpu as pltpu


# ----------------------------------------------------------------------------------------------
# Problem sizes (small, consistent with the module's forward)
# ----------------------------------------------------------------------------------------------
B = 2            # batch
C_IN = 4         # image channels
IMG = 16         # image spatial size (H = W)
P = IMG * IMG    # patches per image (256)
C_ENC = 16       # surrogate encoder output channels (== out_dim of fetch_encoder)
VOCAB = 64       # vocab_size
EMBED = 32       # embed_size
HIDDEN = 32      # hidden_size
T = 8            # caption timesteps
KK = 3           # conv kernel size of the surrogate encoder
K = C_IN * KK * KK   # 36
LANE = 4 * HIDDEN    # 128 == vreg lane width

# packed-parameter slab row offsets (every region start is 8-sublane aligned)
W_CONV_R0 = 0            # (K, C_ENC)            rows   0..35
W_ENC_R0 = 40            # (C_ENC, EMBED)        rows  40..55
W_IH_R0 = 56             # (EMBED, 4H)           rows  56..87
W_HH_R0 = 88             # (HIDDEN, 4H)          rows  88..119
W_OUT_R0 = 120           # (HIDDEN, VOCAB->128)  rows 120..151
B_CONV_R = 152           # (1, C_ENC)
B_ENC_R = 153            # (1, EMBED)
B_GATES_R = 154          # (1, 4H)   = b_ih + b_hh
B_OUT_R = 155            # (1, VOCAB->128)
PACK_ROWS = 160


# ----------------------------------------------------------------------------------------------
# Fused kernel: encoder surrogate + encoder_out + hoisted x-gates + T-step LSTMCell + decoder_out
# ----------------------------------------------------------------------------------------------
def show_and_tell_kernel(patch_ref, cap_ref, pw_ref, out_ref, h_all_sc):
    # --- static, aligned slices of the single packed parameter slab (one DMA for all weights) ---
    w_conv = pw_ref[W_CONV_R0:W_CONV_R0 + K, 0:C_ENC].astype(jnp.bfloat16)   # (36, 16) bf16
    b_conv = pw_ref[B_CONV_R:B_CONV_R + 1, 0:C_ENC]                          # (1, 16)
    w_enc = pw_ref[W_ENC_R0:W_ENC_R0 + C_ENC, 0:EMBED]                       # (16, 32)
    b_enc = pw_ref[B_ENC_R:B_ENC_R + 1, 0:EMBED]                             # (1, 32)
    w_ih = pw_ref[W_IH_R0:W_IH_R0 + EMBED, :]                                # (32, 128)
    w_hh = pw_ref[W_HH_R0:W_HH_R0 + HIDDEN, :]                               # (32, 128)
    w_out = pw_ref[W_OUT_R0:W_OUT_R0 + HIDDEN, :]                            # (32, 128) padded
    b_gates = pw_ref[B_GATES_R:B_GATES_R + 1, :]                             # (1, 128)
    b_out = pw_ref[B_OUT_R:B_OUT_R + 1, :]                                   # (1, 128) padded

    # --- encoder surrogate: conv-as-matmul (bf16 in, f32 acc) + ReLU + avg-pool-as-matmul ---
    y = jnp.dot(patch_ref[...], w_conv, preferred_element_type=jnp.float32)  # (B*P, C_ENC)
    y = jnp.maximum(y + b_conv, 0.0)                                         # ReLU
    # pool[b, j] = 1/P iff j // P == b  (built in-kernel from iotas: no extra operand DMA)
    row = jax.lax.broadcasted_iota(jnp.int32, (B, B * P), 0)
    col = jax.lax.broadcasted_iota(jnp.int32, (B, B * P), 1)
    lo = row * P
    pool = jnp.where((col >= lo) & (col < lo + P),
                     jnp.float32(1.0 / P), jnp.float32(0.0))                 # (B, B*P)
    feat = jnp.dot(pool, y, preferred_element_type=jnp.float32)              # (B, C_ENC)

    # --- encoder_out projection: the t==0 decoder input ---
    x0 = jnp.dot(feat, w_enc, preferred_element_type=jnp.float32) + b_enc    # (B, E)

    # --- hoisted input-to-hidden gate halves (computed ONCE, outside the recurrence) ---
    pre_cap = jnp.dot(cap_ref[...], w_ih,
                      preferred_element_type=jnp.float32) + b_gates          # (T*B, 4H)
    pre_x0 = jnp.dot(x0, w_ih, preferred_element_type=jnp.float32) + b_gates  # (B, 4H)

    h = jnp.zeros((B, HIDDEN), jnp.float32)
    c = jnp.zeros((B, HIDDEN), jnp.float32)

    # --- teacher-forced recurrence, fully unrolled (T is small and static) ---
    for t in range(T):
        pre_t = pre_x0 if t == 0 else pre_cap[t * B:(t + 1) * B, :]          # sublane row slice
        # explicit VPU add of hoisted x-gates + h @ W_hh (v5e/v6e-friendly; v7x MRB could
        # accumulate in place but the add is negligible at (2,128))
        gates = pre_t + jnp.dot(h, w_hh, preferred_element_type=jnp.float32)  # (B, 4H)

        sg = jax.nn.sigmoid(gates)                                           # one EUP pass
        th = jnp.tanh(gates)                                                 # one EUP pass
        i_g = sg[:, 0 * HIDDEN:1 * HIDDEN]
        f_g = sg[:, 1 * HIDDEN:2 * HIDDEN]
        g_g = th[:, 2 * HIDDEN:3 * HIDDEN]
        o_g = sg[:, 3 * HIDDEN:4 * HIDDEN]

        c = f_g * c + i_g * g_g
        h = o_g * jnp.tanh(c)
        h_all_sc[t * B:(t + 1) * B, :] = h                                   # static-offset store

    # --- deferred vocab projection: one (T*B,H)@(H,128) matmul + one lane-dense store ---
    out_ref[...] = jnp.dot(h_all_sc[...], w_out,
                           preferred_element_type=jnp.float32) + b_out       # (T*B, 128)


def run_show_and_tell(patches_bf16, cap_tmajor, packed_w):
    out = pl.pallas_call(
        show_and_tell_kernel,
        out_shape=jax.ShapeDtypeStruct((T * B, LANE), jnp.float32),
        scratch_shapes=[pltpu.VMEM((T * B, HIDDEN), jnp.float32)],
    )(patches_bf16, cap_tmajor, packed_w)
    # rows are t-major: row (t*B + b) -> (B, T, V) via free wrapper-side plumbing;
    # slice off the lane padding (VOCAB=64 < 128)
    return jnp.transpose(out[:, :VOCAB].reshape(T, B, VOCAB), (1, 0, 2))


# ----------------------------------------------------------------------------------------------
# Glue: im2col for the 3x3 "same" conv surrogate encoder
# ----------------------------------------------------------------------------------------------
def im2col(x):
    # x: (B, C, H, W) NCHW -> (B, H*W, C*3*3)
    xp = jnp.pad(x, ((0, 0), (0, 0), (1, 1), (1, 1)))
    cols = []
    for dy in range(KK):
        for dx in range(KK):
            cols.append(xp[:, :, dy:dy + IMG, dx:dx + IMG])
    pat = jnp.stack(cols, axis=2)                       # (B, C, 9, H, W)
    pat = pat.transpose(0, 3, 4, 1, 2)                  # (B, H, W, C, 9)
    return pat.reshape(B, P, K)


# ----------------------------------------------------------------------------------------------
# Full forward (ShowAndTellNet.forward with decoder='lstm')
# ----------------------------------------------------------------------------------------------
@jax.jit
def show_and_tell_forward(x, captions, params):
    patches_bf16 = im2col(x).reshape(B * P, K).astype(jnp.bfloat16)          # (B*P, K) bf16
    cap_emb = jnp.take(params["embed"], captions, axis=0)                    # self.embed(captions)
    cap_tmajor = cap_emb.transpose(1, 0, 2).reshape(T * B, EMBED)            # t-major rows
    return run_show_and_tell(patches_bf16, cap_tmajor, params["packed_w"])


# Pure-JAX reference (same math, unfused) for a sanity check
def reference_forward(x, captions, params):
    HP = jax.lax.Precision.HIGHEST
    patches = im2col(x).astype(jnp.bfloat16)
    wc = params["w_conv"].astype(jnp.bfloat16)
    y = jax.nn.relu(jnp.einsum("bpk,kc->bpc", patches, wc,
                               preferred_element_type=jnp.float32) + params["b_conv"])
    feat = jnp.mean(y, axis=1)                                               # (B, C_ENC)
    x_emb = jnp.dot(feat, params["w_enc"], precision=HP) + params["b_enc"]
    cap_emb = jnp.take(params["embed"], captions, axis=0)
    h = jnp.zeros((B, HIDDEN), jnp.float32)
    c = jnp.zeros((B, HIDDEN), jnp.float32)
    outs = []
    for t in range(T):
        xt = x_emb if t == 0 else cap_emb[:, t, :]
        gates = (jnp.dot(xt, params["w_ih"], precision=HP) + params["b_ih"]
                 + jnp.dot(h, params["w_hh"], precision=HP) + params["b_hh"])
        i_g = jax.nn.sigmoid(gates[:, 0 * HIDDEN:1 * HIDDEN])
        f_g = jax.nn.sigmoid(gates[:, 1 * HIDDEN:2 * HIDDEN])
        g_g = jnp.tanh(gates[:, 2 * HIDDEN:3 * HIDDEN])
        o_g = jax.nn.sigmoid(gates[:, 3 * HIDDEN:4 * HIDDEN])
        c = f_g * c + i_g * g_g
        h = o_g * jnp.tanh(c)
        outs.append(jnp.dot(h, params["w_out"], precision=HP) + params["b_out"])
    return jnp.stack(outs, axis=1)


def init_params(key):
    ks = jax.random.split(key, 10)

    def dense(k, shape, fan_in):
        return (jax.random.normal(k, shape, jnp.float32) / np.sqrt(fan_in)).astype(jnp.float32)

    p = {
        # surrogate encoder conv (weights pre-flattened / pre-transposed to (K, C_ENC))
        "w_conv": dense(ks[0], (K, C_ENC), K),
        "b_conv": dense(ks[1], (1, C_ENC), 1) * 0.1,
        # encoder_out: Linear(out_dim -> embed), stored as (out_dim, embed)
        "w_enc": dense(ks[2], (C_ENC, EMBED), C_ENC),
        "b_enc": dense(ks[3], (1, EMBED), 1) * 0.1,
        # embedding table (vocab, embed)
        "embed": dense(ks[4], (VOCAB, EMBED), 1),
        # LSTMCell: weight_ih (4H, E) / weight_hh (4H, H) pre-transposed to (E, 4H) / (H, 4H)
        "w_ih": dense(ks[5], (EMBED, 4 * HIDDEN), EMBED),
        "w_hh": dense(ks[6], (HIDDEN, 4 * HIDDEN), HIDDEN),
        "b_ih": dense(ks[7], (1, 4 * HIDDEN), 1) * 0.1,
        "b_hh": dense(ks[8], (1, 4 * HIDDEN), 1) * 0.1,
        # decoder_out: Linear(hidden -> vocab), stored as (hidden, vocab)
        "w_out": dense(ks[9], (HIDDEN, VOCAB), HIDDEN),
        "b_out": jnp.zeros((1, VOCAB), jnp.float32),
    }

    # pack every weight/bias into one (160, 128) f32 slab (static 8-aligned row offsets);
    # w_out / b_out zero-padded to 128 lanes for the lane-dense final matmul + store
    pw = jnp.zeros((PACK_ROWS, LANE), jnp.float32)
    pw = pw.at[W_CONV_R0:W_CONV_R0 + K, 0:C_ENC].set(p["w_conv"])
    pw = pw.at[W_ENC_R0:W_ENC_R0 + C_ENC, 0:EMBED].set(p["w_enc"])
    pw = pw.at[W_IH_R0:W_IH_R0 + EMBED, :].set(p["w_ih"])
    pw = pw.at[W_HH_R0:W_HH_R0 + HIDDEN, :].set(p["w_hh"])
    pw = pw.at[W_OUT_R0:W_OUT_R0 + HIDDEN, 0:VOCAB].set(p["w_out"])
    pw = pw.at[B_CONV_R, 0:C_ENC].set(p["b_conv"][0])
    pw = pw.at[B_ENC_R, 0:EMBED].set(p["b_enc"][0])
    pw = pw.at[B_GATES_R, :].set(p["b_ih"][0] + p["b_hh"][0])   # fused bias
    pw = pw.at[B_OUT_R, 0:VOCAB].set(p["b_out"][0])
    p["packed_w"] = pw
    return p


if __name__ == "__main__":
    key = jax.random.PRNGKey(0)
    k_img, k_cap, k_par = jax.random.split(key, 3)

    x = jax.random.normal(k_img, (B, C_IN, IMG, IMG), jnp.float32)          # image, NCHW
    captions = jax.random.randint(k_cap, (B, T), 0, VOCAB, jnp.int32)       # padded target captions
    params = init_params(k_par)

    out = jax.block_until_ready(show_and_tell_forward(x, captions, params))
    assert out.shape == (B, T, VOCAB), out.shape

    ref = reference_forward(x, captions, params)
    np.testing.assert_allclose(np.asarray(out), np.asarray(ref), rtol=1e-4, atol=1e-4)

    print("KERNEL_OK")
</pallas_src>

<mosaic_0001>
module attributes {stable_mosaic.version = 11 : i64} {
  func.func @show_and_tell_kernel(%arg0: memref<512x36xbf16, #tpu.memory_space<vmem>>, %arg1: memref<16x32xf32, #tpu.memory_space<vmem>>, %arg2: memref<160x128xf32, #tpu.memory_space<vmem>>, %arg3: memref<16x128xf32, #tpu.memory_space<vmem>>, %arg4: memref<16x32xf32, #tpu.memory_space<vmem>>) attributes {dimension_semantics = [], scalar_prefetch = 0 : i64, scratch_operands = 1 : i64, tpu.core_type = #tpu.core_type<tc>} {
    %c0 = arith.constant 0 : index
    %c0_0 = arith.constant 0 : index
    %0 = vector.load %arg2[%c0, %c0_0] : memref<160x128xf32, #tpu.memory_space<vmem>>, vector<36x16xf32>
    %1 = arith.truncf %0 : vector<36x16xf32> to vector<36x16xbf16>
    %c152 = arith.constant 152 : index
    %c0_1 = arith.constant 0 : index
    %2 = vector.load %arg2[%c152, %c0_1] : memref<160x128xf32, #tpu.memory_space<vmem>>, vector<1x16xf32>
    %c40 = arith.constant 40 : index
    %c0_2 = arith.constant 0 : index
    %3 = vector.load %arg2[%c40, %c0_2] : memref<160x128xf32, #tpu.memory_space<vmem>>, vector<16x32xf32>
    %c153 = arith.constant 153 : index
    %c0_3 = arith.constant 0 : index
    %4 = vector.load %arg2[%c153, %c0_3] : memref<160x128xf32, #tpu.memory_space<vmem>>, vector<1x32xf32>
    %c56 = arith.constant 56 : index
    %c0_4 = arith.constant 0 : index
    %5 = vector.load %arg2[%c56, %c0_4] : memref<160x128xf32, #tpu.memory_space<vmem>>, vector<32x128xf32>
    %c88 = arith.constant 88 : index
    %c0_5 = arith.constant 0 : index
    %6 = vector.load %arg2[%c88, %c0_5] : memref<160x128xf32, #tpu.memory_space<vmem>>, vector<32x128xf32>
    %c120 = arith.constant 120 : index
    %c0_6 = arith.constant 0 : index
    %7 = vector.load %arg2[%c120, %c0_6] : memref<160x128xf32, #tpu.memory_space<vmem>>, vector<32x128xf32>
    %c154 = arith.constant 154 : index
    %c0_7 = arith.constant 0 : index
    %8 = vector.load %arg2[%c154, %c0_7] : memref<160x128xf32, #tpu.memory_space<vmem>>, vector<1x128xf32>
    %c155 = arith.constant 155 : index
    %c0_8 = arith.constant 0 : index
    %9 = vector.load %arg2[%c155, %c0_8] : memref<160x128xf32, #tpu.memory_space<vmem>>, vector<1x128xf32>
    %c0_9 = arith.constant 0 : index
    %c0_10 = arith.constant 0 : index
    %10 = vector.load %arg0[%c0_9, %c0_10] : memref<512x36xbf16, #tpu.memory_space<vmem>>, vector<512x36xbf16>
    %cst = arith.constant dense<0.000000e+00> : vector<512x16xf32>
    %11 = tpu.matmul %10, %1, %cst {dimension_numbers = #tpu.dot_dimension_numbers<[1], [0], [0], [1], [0, 0, 1, 1], [], []>} : vector<512x36xbf16>, vector<36x16xbf16>, vector<512x16xf32> -> vector<512x16xf32>
    %12 = vector.broadcast %2 : vector<1x16xf32> to vector<512x16xf32>
    %13 = arith.addf %11, %12 : vector<512x16xf32>
    %cst_11 = arith.constant 0.000000e+00 : f32
    %14 = vector.broadcast %cst_11 : f32 to vector<512x16xf32>
    %15 = arith.maximumf %13, %14 : vector<512x16xf32>
    %16 = tpu.iota {dimensions = array<i32: 0>} : vector<2x512xi32>
    %17 = tpu.iota {dimensions = array<i32: 1>} : vector<2x512xi32>
    %c256_i32 = arith.constant 256 : i32
    %18 = vector.broadcast %c256_i32 : i32 to vector<2x512xi32>
    %19 = arith.muli %16, %18 : vector<2x512xi32>
    %20 = arith.cmpi sge, %17, %19 : vector<2x512xi32>
    %c256_i32_12 = arith.constant 256 : i32
    %21 = vector.broadcast %c256_i32_12 : i32 to vector<2x512xi32>
    %22 = arith.addi %19, %21 : vector<2x512xi32>
    %23 = arith.cmpi slt, %17, %22 : vector<2x512xi32>
    %24 = arith.andi %20, %23 : vector<2x512xi1>
    %cst_13 = arith.constant 3.906250e-03 : f32
    %cst_14 = arith.constant 0.000000e+00 : f32
    %25 = vector.broadcast %cst_13 : f32 to vector<2x512xf32>
    %26 = vector.broadcast %cst_14 : f32 to vector<2x512xf32>
    %27 = arith.select %24, %25, %26 : vector<2x512xi1>, vector<2x512xf32>
    %cst_15 = arith.constant dense<0.000000e+00> : vector<2x16xf32>
    %28 = tpu.matmul %27, %15, %cst_15 {dimension_numbers = #tpu.dot_dimension_numbers<[1], [0], [0], [1], [0, 0, 1, 1], [], []>} : vector<2x512xf32>, vector<512x16xf32>, vector<2x16xf32> -> vector<2x16xf32>
    %cst_16 = arith.constant dense<0.000000e+00> : vector<2x32xf32>
    %29 = tpu.matmul %28, %3, %cst_16 {dimension_numbers = #tpu.dot_dimension_numbers<[1], [0], [0], [1], [0, 0, 1, 1], [], []>} : vector<2x16xf32>, vector<16x32xf32>, vector<2x32xf32> -> vector<2x32xf32>
    %30 = vector.broadcast %4 : vector<1x32xf32> to vector<2x32xf32>
    %31 = arith.addf %29, %30 : vector<2x32xf32>
    %c0_17 = arith.constant 0 : index
    %c0_18 = arith.constant 0 : index
    %32 = vector.load %arg1[%c0_17, %c0_18] : memref<16x32xf32, #tpu.memory_space<vmem>>, vector<16x32xf32>
    %cst_19 = arith.constant dense<0.000000e+00> : vector<16x128xf32>
    %33 = tpu.matmul %32, %5, %cst_19 {dimension_numbers = #tpu.dot_dimension_numbers<[1], [0], [0], [1], [0, 0, 1, 1], [], []>} : vector<16x32xf32>, vector<32x128xf32>, vector<16x128xf32> -> vector<16x128xf32>
    %34 = vector.broadcast %8 : vector<1x128xf32> to vector<16x128xf32>
    %35 = arith.addf %33, %34 : vector<16x128xf32>
    %cst_20 = arith.constant dense<0.000000e+00> : vector<2x128xf32>
    %36 = tpu.matmul %31, %5, %cst_20 {dimension_numbers = #tpu.dot_dimension_numbers<[1], [0], [0], [1], [0, 0, 1, 1], [], []>} : vector<2x32xf32>, vector<32x128xf32>, vector<2x128xf32> -> vector<2x128xf32>
    %37 = vector.broadcast %8 : vector<1x128xf32> to vector<2x128xf32>
    %38 = arith.addf %36, %37 : vector<2x128xf32>
    %cst_21 = arith.constant 0.000000e+00 : f32
    %39 = vector.broadcast %cst_21 : f32 to vector<2x32xf32>
    %cst_22 = arith.constant 0.000000e+00 : f32
    %40 = vector.broadcast %cst_22 : f32 to vector<2x32xf32>
    %cst_23 = arith.constant dense<0.000000e+00> : vector<2x128xf32>
    %41 = tpu.matmul %39, %6, %cst_23 {dimension_numbers = #tpu.dot_dimension_numbers<[1], [0], [0], [1], [0, 0, 1, 1], [], []>} : vector<2x32xf32>, vector<32x128xf32>, vector<2x128xf32> -> vector<2x128xf32>
    %42 = arith.addf %38, %41 : vector<2x128xf32>
    %43 = arith.negf %42 : vector<2x128xf32>
    %44 = math.exp %43 : vector<2x128xf32>
    %cst_24 = arith.constant 1.000000e+00 : f32
    %45 = vector.broadcast %cst_24 : f32 to vector<2x128xf32>
    %46 = arith.addf %45, %44 : vector<2x128xf32>
    %47 = arith.divf %45, %46 : vector<2x128xf32>
    %48 = math.tanh %42 : vector<2x128xf32>
    %49 = vector.extract_strided_slice %47 {offsets = [0, 0], sizes = [2, 32], strides = [1, 1]} : vector<2x128xf32> to vector<2x32xf32>
    %50 = vector.extract_strided_slice %47 {offsets = [0, 32], sizes = [2, 32], strides = [1, 1]} : vector<2x128xf32> to vector<2x32xf32>
    %51 = vector.extract_strided_slice %48 {offsets = [0, 64], sizes = [2, 32], strides = [1, 1]} : vector<2x128xf32> to vector<2x32xf32>
    %52 = vector.extract_strided_slice %47 {offsets = [0, 96], sizes = [2, 32], strides = [1, 1]} : vector<2x128xf32> to vector<2x32xf32>
    %53 = arith.mulf %50, %40 : vector<2x32xf32>
    %54 = arith.mulf %49, %51 : vector<2x32xf32>
    %55 = arith.addf %53, %54 : vector<2x32xf32>
    %56 = math.tanh %55 : vector<2x32xf32>
    %57 = arith.mulf %52, %56 : vector<2x32xf32>
    %c0_25 = arith.constant 0 : index
    %c0_26 = arith.constant 0 : index
    %58 = vector.load %arg4[%c0_25, %c0_26] : memref<16x32xf32, #tpu.memory_space<vmem>>, vector<2x32xf32>
    tpu.vector_store %arg4[%c0_25, %c0_26], %57 {strides = array<i32>} : memref<16x32xf32, #tpu.memory_space<vmem>>, vector<2x32xf32>,
    %59 = vector.extract_strided_slice %35 {offsets = [2, 0], sizes = [2, 128], strides = [1, 1]} : vector<16x128xf32> to vector<2x128xf32>
    %cst_27 = arith.constant dense<0.000000e+00> : vector<2x128xf32>
    %60 = tpu.matmul %57, %6, %cst_27 {dimension_numbers = #tpu.dot_dimension_numbers<[1], [0], [0], [1], [0, 0, 1, 1], [], []>} : vector<2x32xf32>, vector<32x128xf32>, vector<2x128xf32> -> vector<2x128xf32>
    %61 = arith.addf %59, %60 : vector<2x128xf32>
    %62 = arith.negf %61 : vector<2x128xf32>
    %63 = math.exp %62 : vector<2x128xf32>
    %cst_28 = arith.constant 1.000000e+00 : f32
    %64 = vector.broadcast %cst_28 : f32 to vector<2x128xf32>
    %65 = arith.addf %64, %63 : vector<2x128xf32>
    %66 = arith.divf %64, %65 : vector<2x128xf32>
    %67 = math.tanh %61 : vector<2x128xf32>
    %68 = vector.extract_strided_slice %66 {offsets = [0, 0], sizes = [2, 32], strides = [1, 1]} : vector<2x128xf32> to vector<2x32xf32>
    %69 = vector.extract_strided_slice %66 {offsets = [0, 32], sizes = [2, 32], strides = [1, 1]} : vector<2x128xf32> to vector<2x32xf32>
    %70 = vector.extract_strided_slice %67 {offsets = [0, 64], sizes = [2, 32], strides = [1, 1]} : vector<2x128xf32> to vector<2x32xf32>
    %71 = vector.extract_strided_slice %66 {offsets = [0, 96], sizes = [2, 32], strides = [1, 1]} : vector<2x128xf32> to vector<2x32xf32>
    %72 = arith.mulf %69, %55 : vector<2x32xf32>
    %73 = arith.mulf %68, %70 : vector<2x32xf32>
    %74 = arith.addf %72, %73 : vector<2x32xf32>
    %75 = math.tanh %74 : vector<2x32xf32>
    %76 = arith.mulf %71, %75 : vector<2x32xf32>
    %c2 = arith.constant 2 : index
    %c0_29 = arith.constant 0 : index
    %77 = vector.load %arg4[%c2, %c0_29] : memref<16x32xf32, #tpu.memory_space<vmem>>, vector<2x32xf32>
    tpu.vector_store %arg4[%c2, %c0_29], %76 {strides = array<i32>} : memref<16x32xf32, #tpu.memory_space<vmem>>, vector<2x32xf32>,
    %78 = vector.extract_strided_slice %35 {offsets = [4, 0], sizes = [2, 128], strides = [1, 1]} : vector<16x128xf32> to vector<2x128xf32>
    %cst_30 = arith.constant dense<0.000000e+00> : vector<2x128xf32>
    %79 = tpu.matmul %76, %6, %cst_30 {dimension_numbers = #tpu.dot_dimension_numbers<[1], [0], [0], [1], [0, 0, 1, 1], [], []>} : vector<2x32xf32>, vector<32x128xf32>, vector<2x128xf32> -> vector<2x128xf32>
    %80 = arith.addf %78, %79 : vector<2x128xf32>
    %81 = arith.negf %80 : vector<2x128xf32>
    %82 = math.exp %81 : vector<2x128xf32>
    %cst_31 = arith.constant 1.000000e+00 : f32
    %83 = vector.broadcast %cst_31 : f32 to vector<2x128xf32>
    %84 = arith.addf %83, %82 : vector<2x128xf32>
    %85 = arith.divf %83, %84 : vector<2x128xf32>
    %86 = math.tanh %80 : vector<2x128xf32>
    %87 = vector.extract_strided_slice %85 {offsets = [0, 0], sizes = [2, 32], strides = [1, 1]} : vector<2x128xf32> to vector<2x32xf32>
    %88 = vector.extract_strided_slice %85 {offsets = [0, 32], sizes = [2, 32], strides = [1, 1]} : vector<2x128xf32> to vector<2x32xf32>
    %89 = vector.extract_strided_slice %86 {offsets = [0, 64], sizes = [2, 32], strides = [1, 1]} : vector<2x128xf32> to vector<2x32xf32>
    %90 = vector.extract_strided_slice %85 {offsets = [0, 96], sizes = [2, 32], strides = [1, 1]} : vector<2x128xf32> to vector<2x32xf32>
    %91 = arith.mulf %88, %74 : vector<2x32xf32>
    %92 = arith.mulf %87, %89 : vector<2x32xf32>
    %93 = arith.addf %91, %92 : vector<2x32xf32>
    %94 = math.tanh %93 : vector<2x32xf32>
    %95 = arith.mulf %90, %94 : vector<2x32xf32>
    %c4 = arith.constant 4 : index
    %c0_32 = arith.constant 0 : index
    %96 = vector.load %arg4[%c4, %c0_32] : memref<16x32xf32, #tpu.memory_space<vmem>>, vector<2x32xf32>
    tpu.vector_store %arg4[%c4, %c0_32], %95 {strides = array<i32>} : memref<16x32xf32, #tpu.memory_space<vmem>>, vector<2x32xf32>,
    %97 = vector.extract_strided_slice %35 {offsets = [6, 0], sizes = [2, 128], strides = [1, 1]} : vector<16x128xf32> to vector<2x128xf32>
    %cst_33 = arith.constant dense<0.000000e+00> : vector<2x128xf32>
    %98 = tpu.matmul %95, %6, %cst_33 {dimension_numbers = #tpu.dot_dimension_numbers<[1], [0], [0], [1], [0, 0, 1, 1], [], []>} : vector<2x32xf32>, vector<32x128xf32>, vector<2x128xf32> -> vector<2x128xf32>
    %99 = arith.addf %97, %98 : vector<2x128xf32>
    %100 = arith.negf %99 : vector<2x128xf32>
    %101 = math.exp %100 : vector<2x128xf32>
    %cst_34 = arith.constant 1.000000e+00 : f32
    %102 = vector.broadcast %cst_34 : f32 to vector<2x128xf32>
    %103 = arith.addf %102, %101 : vector<2x128xf32>
    %104 = arith.divf %102, %103 : vector<2x128xf32>
    %105 = math.tanh %99 : vector<2x128xf32>
    %106 = vector.extract_strided_slice %104 {offsets = [0, 0], sizes = [2, 32], strides = [1, 1]} : vector<2x128xf32> to vector<2x32xf32>
    %107 = vector.extract_strided_slice %104 {offsets = [0, 32], sizes = [2, 32], strides = [1, 1]} : vector<2x128xf32> to vector<2x32xf32>
    %108 = vector.extract_strided_slice %105 {offsets = [0, 64], sizes = [2, 32], strides = [1, 1]} : vector<2x128xf32> to vector<2x32xf32>
    %109 = vector.extract_strided_slice %104 {offsets = [0, 96], sizes = [2, 32], strides = [1, 1]} : vector<2x128xf32> to vector<2x32xf32>
    %110 = arith.mulf %107, %93 : vector<2x32xf32>
    %111 = arith.mulf %106, %108 : vector<2x32xf32>
    %112 = arith.addf %110, %111 : vector<2x32xf32>
    %113 = math.tanh %112 : vector<2x32xf32>
    %114 = arith.mulf %109, %113 : vector<2x32xf32>
    %c6 = arith.constant 6 : index
    %c0_35 = arith.constant 0 : index
    %115 = vector.load %arg4[%c6, %c0_35] : memref<16x32xf32, #tpu.memory_space<vmem>>, vector<2x32xf32>
    tpu.vector_store %arg4[%c6, %c0_35], %114 {strides = array<i32>} : memref<16x32xf32, #tpu.memory_space<vmem>>, vector<2x32xf32>,
    %116 = vector.extract_strided_slice %35 {offsets = [8, 0], sizes = [2, 128], strides = [1, 1]} : vector<16x128xf32> to vector<2x128xf32>
    %cst_36 = arith.constant dense<0.000000e+00> : vector<2x128xf32>
    %117 = tpu.matmul %114, %6, %cst_36 {dimension_numbers = #tpu.dot_dimension_numbers<[1], [0], [0], [1], [0, 0, 1, 1], [], []>} : vector<2x32xf32>, vector<32x128xf32>, vector<2x128xf32> -> vector<2x128xf32>
    %118 = arith.addf %116, %117 : vector<2x128xf32>
    %119 = arith.negf %118 : vector<2x128xf32>
    %120 = math.exp %119 : vector<2x128xf32>
    %cst_37 = arith.constant 1.000000e+00 : f32
    %121 = vector.broadcast %cst_37 : f32 to vector<2x128xf32>
    %122 = arith.addf %121, %120 : vector<2x128xf32>
    %123 = arith.divf %121, %122 : vector<2x128xf32>
    %124 = math.tanh %118 : vector<2x128xf32>
    %125 = vector.extract_strided_slice %123 {offsets = [0, 0], sizes = [2, 32], strides = [1, 1]} : vector<2x128xf32> to vector<2x32xf32>
    %126 = vector.extract_strided_slice %123 {offsets = [0, 32], sizes = [2, 32], strides = [1, 1]} : vector<2x128xf32> to vector<2x32xf32>
    %127 = vector.extract_strided_slice %124 {offsets = [0, 64], sizes = [2, 32], strides = [1, 1]} : vector<2x128xf32> to vector<2x32xf32>
    %128 = vector.extract_strided_slice %123 {offsets = [0, 96], sizes = [2, 32], strides = [1, 1]} : vector<2x128xf32> to vector<2x32xf32>
    %129 = arith.mulf %126, %112 : vector<2x32xf32>
    %130 = arith.mulf %125, %127 : vector<2x32xf32>
    %131 = arith.addf %129, %130 : vector<2x32xf32>
    %132 = math.tanh %131 : vector<2x32xf32>
    %133 = arith.mulf %128, %132 : vector<2x32xf32>
    %c8 = arith.constant 8 : index
    %c0_38 = arith.constant 0 : index
    %134 = vector.load %arg4[%c8, %c0_38] : memref<16x32xf32, #tpu.memory_space<vmem>>, vector<2x32xf32>
    tpu.vector_store %arg4[%c8, %c0_38], %133 {strides = array<i32>} : memref<16x32xf32, #tpu.memory_space<vmem>>, vector<2x32xf32>,
    %135 = vector.extract_strided_slice %35 {offsets = [10, 0], sizes = [2, 128], strides = [1, 1]} : vector<16x128xf32> to vector<2x128xf32>
    %cst_39 = arith.constant dense<0.000000e+00> : vector<2x128xf32>
    %136 = tpu.matmul %133, %6, %cst_39 {dimension_numbers = #tpu.dot_dimension_numbers<[1], [0], [0], [1], [0, 0, 1, 1], [], []>} : vector<2x32xf32>, vector<32x128xf32>, vector<2x128xf32> -> vector<2x128xf32>
    %137 = arith.addf %135, %136 : vector<2x128xf32>
    %138 = arith.negf %137 : vector<2x128xf32>
    %139 = math.exp %138 : vector<2x128xf32>
    %cst_40 = arith.constant 1.000000e+00 : f32
    %140 = vector.broadcast %cst_40 : f32 to vector<2x128xf32>
    %141 = arith.addf %140, %139 : vector<2x128xf32>
    %142 = arith.divf %140, %141 : vector<2x128xf32>
    %143 = math.tanh %137 : vector<2x128xf32>
    %144 = vector.extract_strided_slice %142 {offsets = [0, 0], sizes = [2, 32], strides = [1, 1]} : vector<2x128xf32> to vector<2x32xf32>
    %145 = vector.extract_strided_slice %142 {offsets = [0, 32], sizes = [2, 32], strides = [1, 1]} : vector<2x128xf32> to vector<2x32xf32>
    %146 = vector.extract_strided_slice %143 {offsets = [0, 64], sizes = [2, 32], strides = [1, 1]} : vector<2x128xf32> to vector<2x32xf32>
    %147 = vector.extract_strided_slice %142 {offsets = [0, 96], sizes = [2, 32], strides = [1, 1]} : vector<2x128xf32> to vector<2x32xf32>
    %148 = arith.mulf %145, %131 : vector<2x32xf32>
    %149 = arith.mulf %144, %146 : vector<2x32xf32>
    %150 = arith.addf %148, %149 : vector<2x32xf32>
    %151 = math.tanh %150 : vector<2x32xf32>
    %152 = arith.mulf %147, %151 : vector<2x32xf32>
    %c10 = arith.constant 10 : index
    %c0_41 = arith.constant 0 : index
    %153 = vector.load %arg4[%c10, %c0_41] : memref<16x32xf32, #tpu.memory_space<vmem>>, vector<2x32xf32>
    tpu.vector_store %arg4[%c10, %c0_41], %152 {strides = array<i32>} : memref<16x32xf32, #tpu.memory_space<vmem>>, vector<2x32xf32>,
    %154 = vector.extract_strided_slice %35 {offsets = [12, 0], sizes = [2, 128], strides = [1, 1]} : vector<16x128xf32> to vector<2x128xf32>
    %cst_42 = arith.constant dense<0.000000e+00> : vector<2x128xf32>
    %155 = tpu.matmul %152, %6, %cst_42 {dimension_numbers = #tpu.dot_dimension_numbers<[1], [0], [0], [1], [0, 0, 1, 1], [], []>} : vector<2x32xf32>, vector<32x128xf32>, vector<2x128xf32> -> vector<2x128xf32>
    %156 = arith.addf %154, %155 : vector<2x128xf32>
    %157 = arith.negf %156 : vector<2x128xf32>
    %158 = math.exp %157 : vector<2x128xf32>
    %cst_43 = arith.constant 1.000000e+00 : f32
    %159 = vector.broadcast %cst_43 : f32 to vector<2x128xf32>
    %160 = arith.addf %159, %158 : vector<2x128xf32>
    %161 = arith.divf %159, %160 : vector<2x128xf32>
    %162 = math.tanh %156 : vector<2x128xf32>
    %163 = vector.extract_strided_slice %161 {offsets = [0, 0], sizes = [2, 32], strides = [1, 1]} : vector<2x128xf32> to vector<2x32xf32>
    %164 = vector.extract_strided_slice %161 {offsets = [0, 32], sizes = [2, 32], strides = [1, 1]} : vector<2x128xf32> to vector<2x32xf32>
    %165 = vector.extract_strided_slice %162 {offsets = [0, 64], sizes = [2, 32], strides = [1, 1]} : vector<2x128xf32> to vector<2x32xf32>
    %166 = vector.extract_strided_slice %161 {offsets = [0, 96], sizes = [2, 32], strides = [1, 1]} : vector<2x128xf32> to vector<2x32xf32>
    %167 = arith.mulf %164, %150 : vector<2x32xf32>
    %168 = arith.mulf %163, %165 : vector<2x32xf32>
    %169 = arith.addf %167, %168 : vector<2x32xf32>
    %170 = math.tanh %169 : vector<2x32xf32>
    %171 = arith.mulf %166, %170 : vector<2x32xf32>
    %c12 = arith.constant 12 : index
    %c0_44 = arith.constant 0 : index
    %172 = vector.load %arg4[%c12, %c0_44] : memref<16x32xf32, #tpu.memory_space<vmem>>, vector<2x32xf32>
    tpu.vector_store %arg4[%c12, %c0_44], %171 {strides = array<i32>} : memref<16x32xf32, #tpu.memory_space<vmem>>, vector<2x32xf32>,
    %173 = vector.extract_strided_slice %35 {offsets = [14, 0], sizes = [2, 128], strides = [1, 1]} : vector<16x128xf32> to vector<2x128xf32>
    %cst_45 = arith.constant dense<0.000000e+00> : vector<2x128xf32>
    %174 = tpu.matmul %171, %6, %cst_45 {dimension_numbers = #tpu.dot_dimension_numbers<[1], [0], [0], [1], [0, 0, 1, 1], [], []>} : vector<2x32xf32>, vector<32x128xf32>, vector<2x128xf32> -> vector<2x128xf32>
    %175 = arith.addf %173, %174 : vector<2x128xf32>
    %176 = arith.negf %175 : vector<2x128xf32>
    %177 = math.exp %176 : vector<2x128xf32>
    %cst_46 = arith.constant 1.000000e+00 : f32
    %178 = vector.broadcast %cst_46 : f32 to vector<2x128xf32>
    %179 = arith.addf %178, %177 : vector<2x128xf32>
    %180 = arith.divf %178, %179 : vector<2x128xf32>
    %181 = math.tanh %175 : vector<2x128xf32>
    %182 = vector.extract_strided_slice %180 {offsets = [0, 0], sizes = [2, 32], strides = [1, 1]} : vector<2x128xf32> to vector<2x32xf32>
    %183 = vector.extract_strided_slice %180 {offsets = [0, 32], sizes = [2, 32], strides = [1, 1]} : vector<2x128xf32> to vector<2x32xf32>
    %184 = vector.extract_strided_slice %181 {offsets = [0, 64], sizes = [2, 32], strides = [1, 1]} : vector<2x128xf32> to vector<2x32xf32>
    %185 = vector.extract_strided_slice %180 {offsets = [0, 96], sizes = [2, 32], strides = [1, 1]} : vector<2x128xf32> to vector<2x32xf32>
    %186 = arith.mulf %183, %169 : vector<2x32xf32>
    %187 = arith.mulf %182, %184 : vector<2x32xf32>
    %188 = arith.addf %186, %187 : vector<2x32xf32>
    %189 = math.tanh %188 : vector<2x32xf32>
    %190 = arith.mulf %185, %189 : vector<2x32xf32>
    %c14 = arith.constant 14 : index
    %c0_47 = arith.constant 0 : index
    %191 = vector.load %arg4[%c14, %c0_47] : memref<16x32xf32, #tpu.memory_space<vmem>>, vector<2x32xf32>
    tpu.vector_store %arg4[%c14, %c0_47], %190 {strides = array<i32>} : memref<16x32xf32, #tpu.memory_space<vmem>>, vector<2x32xf32>,
    %c0_48 = arith.constant 0 : index
    %c0_49 = arith.constant 0 : index
    %192 = vector.load %arg4[%c0_48, %c0_49] : memref<16x32xf32, #tpu.memory_space<vmem>>, vector<16x32xf32>
    %cst_50 = arith.constant dense<0.000000e+00> : vector<16x128xf32>
    %193 = tpu.matmul %192, %7, %cst_50 {dimension_numbers = #tpu.dot_dimension_numbers<[1], [0], [0], [1], [0, 0, 1, 1], [], []>} : vector<16x32xf32>, vector<32x128xf32>, vector<16x128xf32> -> vector<16x128xf32>
    %194 = vector.broadcast %9 : vector<1x128xf32> to vector<16x128xf32>
    %195 = arith.addf %193, %194 : vector<16x128xf32>
    %c0_51 = arith.constant 0 : index
    %c0_52 = arith.constant 0 : index
    %196 = vector.load %arg3[%c0_51, %c0_52] : memref<16x128xf32, #tpu.memory_space<vmem>>, vector<16x128xf32>
    tpu.vector_store %arg3[%c0_51, %c0_52], %195 {strides = array<i32>} : memref<16x128xf32, #tpu.memory_space<vmem>>, vector<16x128xf32>,
    return
  }
}

</mosaic_0001>

<llo_original>
// kernel: show_and_tell_forward.1
$region0: #{show_and_tell_forward.1}
  #allocation0 [shape = 'u32[]', space=smem, size = 0x4, offset = 0x4, fixed_abs, tag = 'smem constant byte address 0x4 - core index']
  #allocation1 [shape = 'u32[144,128]{1,0:T(1,128)}', space=vmem, size = 0x12000, scoped, tag = 'internal scratch']
  #allocation2 [shape = 'f32[16,32]{1,0:T(8,128)}', space=vmem, size = 0x2000, scoped, tag = 'scratch operand']
  %s0 = inlined_call_operand.vmem [shape: bf16[512,36], index: 0, kind: input, shape index: {}]
  %s1 = inlined_call_operand.vmem [shape: f32[16,32], index: 1, kind: input, shape index: {}]
  %s2 = inlined_call_operand.vmem [shape: f32[160,128], index: 2, kind: input, shape index: {}]
  %s3 = inlined_call_operand.vmem [shape: f32[16,128], index: 3, kind: output, shape index: {}]
  %s4 = sld [smem:[#allocation0]]
  $region22: #{show_and_tell_forward.1} parent=0
    _
  %s6 = ssub.s32 1, %s4
  %s7 = scalar_select 0, %s6, %s4
  // Predicated region
  $region2: #{show_and_tell_forward.1} parent=0 // pred_check
    _
  $region3: #{show_and_tell_forward.1} parent=0 // pred_check_branch
    %9 = sbr.rel (0) target = $region5
  $region4: #{show_and_tell_forward.1} parent=0 // pred_region
    _
  $region5: #{show_and_tell_forward.1} parent=0 // pred_fallthru
    _
  // Predicated region
  $region6: #{show_and_tell_forward.1} parent=0 // pred_check
    _
  $region7: #{show_and_tell_forward.1} parent=0 // pred_check_branch
    %11 = sbr.rel (0) target = $region9
  $region8: #{show_and_tell_forward.1} parent=0 // pred_region
    _
  $region9: #{show_and_tell_forward.1} parent=0 // pred_fallthru
    _
  // Predicated region
  $region10: #{show_and_tell_forward.1} parent=0 // pred_check
    _
  $region11: #{show_and_tell_forward.1} parent=0 // pred_check_branch
    %13 = sbr.rel (0) target = $region13
  $region12: #{show_and_tell_forward.1} parent=0 // pred_region
    _
  $region13: #{show_and_tell_forward.1} parent=0 // pred_fallthru
    _
  %v15 = vld [vmem:[%s2] sm:$0xff]
  %v16 = vld [vmem:[%s2 + $0x8] sm:$0xff]
  %v17 = vld [vmem:[%s2 + $0x10] sm:$0xff]
  %v18 = vld [vmem:[%s2 + $0x18] sm:$0xff]
  %v19 = vld [vmem:[%s2 + $0x20] sm:$0xf]
  %v20 = vpack.c.bf16 %v16, %v15
  %v21 = vpack.c.bf16 %v18, %v17
  %v22 = vpack.c.bf16 %v19, %v19
  %v23 = vld [vmem:[%s2 + $0x98] sm:$0x1]
  %v24 = vld [vmem:[%s2 + $0x28] sm:$0xff]
  %v25 = vld [vmem:[%s2 + $0x30] sm:$0xff]
  %v26 = vld [vmem:[%s2 + $0x99] sm:$0x1]
  %v27 = vld [vmem:[%s2 + $0x38] sm:$0xff]
  %v28 = vld [vmem:[%s2 + $0x40] sm:$0xff]
  %v29 = vld [vmem:[%s2 + $0x48] sm:$0xff]
  %v30 = vld [vmem:[%s2 + $0x50] sm:$0xff]
  %v31 = vld [vmem:[%s2 + $0x58] sm:$0xff]
  %v32 = vld [vmem:[%s2 + $0x60] sm:$0xff]
  %v33 = vld [vmem:[%s2 + $0x68] sm:$0xff]
  %v34 = vld [vmem:[%s2 + $0x70] sm:$0xff]
  %v35 = vld [vmem:[%s2 + $0x78] sm:$0xff]
  %v36 = vld [vmem:[%s2 + $0x80] sm:$0xff]
  %v37 = vld [vmem:[%s2 + $0x88] sm:$0xff]
  %v38 = vld [vmem:[%s2 + $0x90] sm:$0xff]
  %v39 = vld [vmem:[%s2 + $0x9a] sm:$0x1]
  %v40 = vld [vmem:[%s2 + $0x9b] sm:$0x1]
  %v41 = vld [vmem:[%s0] sm:$0xf]
  %v42 = vld [vmem:[%s0 + $0x4] sm:$0xf]
  %v43 = vld [vmem:[%s0 + $0x8] sm:$0xf]
  %v44 = vld [vmem:[%s0 + $0xc] sm:$0xf]
  %v45 = vld [vmem:[%s0 + $0x10] sm:$0xf]
  %v46 = vld [vmem:[%s0 + $0x14] sm:$0xf]
  %v47 = vld [vmem:[%s0 + $0x18] sm:$0xf]
  %v48 = vld [vmem:[%s0 + $0x1c] sm:$0xf]
  %v49 = vld [vmem:[%s0 + $0x20] sm:$0xf]
  %v50 = vld [vmem:[%s0 + $0x24] sm:$0xf]
  %v51 = vld [vmem:[%s0 + $0x28] sm:$0xf]
  %v52 = vld [vmem:[%s0 + $0x2c] sm:$0xf]
  %v53 = vld [vmem:[%s0 + $0x30] sm:$0xf]
  %v54 = vld [vmem:[%s0 + $0x34] sm:$0xf]
  %v55 = vld [vmem:[%s0 + $0x38] sm:$0xf]
  %v56 = vld [vmem:[%s0 + $0x3c] sm:$0xf]
  %v57 = vld [vmem:[%s0 + $0x40] sm:$0xf]
  %v58 = vld [vmem:[%s0 + $0x44] sm:$0xf]
  %v59 = vld [vmem:[%s0 + $0x48] sm:$0xf]
  %v60 = vld [vmem:[%s0 + $0x4c] sm:$0xf]
  %v61 = vld [vmem:[%s0 + $0x50] sm:$0xf]
  %v62 = vld [vmem:[%s0 + $0x54] sm:$0xf]
  %v63 = vld [vmem:[%s0 + $0x58] sm:$0xf]
  %v64 = vld [vmem:[%s0 + $0x5c] sm:$0xf]
  %v65 = vld [vmem:[%s0 + $0x60] sm:$0xf]
  %v66 = vld [vmem:[%s0 + $0x64] sm:$0xf]
  %v67 = vld [vmem:[%s0 + $0x68] sm:$0xf]
  %v68 = vld [vmem:[%s0 + $0x6c] sm:$0xf]
  %v69 = vld [vmem:[%s0 + $0x70] sm:$0xf]
  %v70 = vld [vmem:[%s0 + $0x74] sm:$0xf]
  %v71 = vld [vmem:[%s0 + $0x78] sm:$0xf]
  %v72 = vld [vmem:[%s0 + $0x7c] sm:$0xf]
  %v73 = vld [vmem:[%s0 + $0x80] sm:$0xf]
  %v74 = vld [vmem:[%s0 + $0x84] sm:$0xf]
  %v75 = vld [vmem:[%s0 + $0x88] sm:$0xf]
  %v76 = vld [vmem:[%s0 + $0x8c] sm:$0xf]
  %v77 = vld [vmem:[%s0 + $0x90] sm:$0xf]
  %v78 = vld [vmem:[%s0 + $0x94] sm:$0xf]
  %v79 = vld [vmem:[%s0 + $0x98] sm:$0xf]
  %v80 = vld [vmem:[%s0 + $0x9c] sm:$0xf]
  %v81 = vld [vmem:[%s0 + $0xa0] sm:$0xf]
  %v82 = vld [vmem:[%s0 + $0xa4] sm:$0xf]
  %v83 = vld [vmem:[%s0 + $0xa8] sm:$0xf]
  %v84 = vld [vmem:[%s0 + $0xac] sm:$0xf]
  %v85 = vld [vmem:[%s0 + $0xb0] sm:$0xf]
  %v86 = vld [vmem:[%s0 + $0xb4] sm:$0xf]
  %v87 = vld [vmem:[%s0 + $0xb8] sm:$0xf]
  %v88 = vld [vmem:[%s0 + $0xbc] sm:$0xf]
  %v89 = vld [vmem:[%s0 + $0xc0] sm:$0xf]
  %v90 = vld [vmem:[%s0 + $0xc4] sm:$0xf]
  %v91 = vld [vmem:[%s0 + $0xc8] sm:$0xf]
  %v92 = vld [vmem:[%s0 + $0xcc] sm:$0xf]
  %v93 = vld [vmem:[%s0 + $0xd0] sm:$0xf]
  %v94 = vld [vmem:[%s0 + $0xd4] sm:$0xf]
  %v95 = vld [vmem:[%s0 + $0xd8] sm:$0xf]
  %v96 = vld [vmem:[%s0 + $0xdc] sm:$0xf]
  %v97 = vld [vmem:[%s0 + $0xe0] sm:$0xf]
  %v98 = vld [vmem:[%s0 + $0xe4] sm:$0xf]
  %v99 = vld [vmem:[%s0 + $0xe8] sm:$0xf]
  %v100 = vld [vmem:[%s0 + $0xec] sm:$0xf]
  %v101 = vld [vmem:[%s0 + $0xf0] sm:$0xf]
  %v102 = vld [vmem:[%s0 + $0xf4] sm:$0xf]
  %v103 = vld [vmem:[%s0 + $0xf8] sm:$0xf]
  %v104 = vld [vmem:[%s0 + $0xfc] sm:$0xf]
  %v105 = vlaneseq
  %v106 = vshrl.u32 %v105, 7
  %v107 = vsub.s32 0, %v106
  %v108 = vrot.slane %v23, %v107
  %v173 = vunpack.c.l.b16 %v41
  %v174 = vunpack.c.l.b16 %v42
  %v175 = vunpack.c.l.b16 %v43
  %v176 = vunpack.c.l.b16 %v44
  %v177 = vunpack.c.l.b16 %v45
  %v178 = vunpack.c.l.b16 %v46
  %v179 = vunpack.c.l.b16 %v47
  %v180 = vunpack.c.l.b16 %v48
  %v181 = vunpack.c.l.b16 %v49
  %v182 = vunpack.c.l.b16 %v50
  %v183 = vunpack.c.l.b16 %v51
  %v184 = vunpack.c.l.b16 %v52
  %v185 = vunpack.c.l.b16 %v53
  %v186 = vunpack.c.l.b16 %v54
  %v187 = vunpack.c.l.b16 %v55
  %v188 = vunpack.c.l.b16 %v56
  %v189 = vunpack.c.l.b16 %v57
  %v190 = vunpack.c.l.b16 %v58
  %v191 = vunpack.c.l.b16 %v59
  %v192 = vunpack.c.l.b16 %v60
  %v193 = vunpack.c.l.b16 %v61
  %v194 = vunpack.c.l.b16 %v62
  %v195 = vunpack.c.l.b16 %v63
  %v196 = vunpack.c.l.b16 %v64
  %v197 = vunpack.c.l.b16 %v65
  %v198 = vunpack.c.l.b16 %v66
  %v199 = vunpack.c.l.b16 %v67
  %v200 = vunpack.c.l.b16 %v68
  %v201 = vunpack.c.l.b16 %v69
  %v202 = vunpack.c.l.b16 %v70
  %v203 = vunpack.c.l.b16 %v71
  %v204 = vunpack.c.l.b16 %v72
  %v205 = vunpack.c.l.b16 %v73
  %v206 = vunpack.c.l.b16 %v74
  %v207 = vunpack.c.l.b16 %v75
  %v208 = vunpack.c.l.b16 %v76
  %v209 = vunpack.c.l.b16 %v77
  %v210 = vunpack.c.l.b16 %v78
  %v211 = vunpack.c.l.b16 %v79
  %v212 = vunpack.c.l.b16 %v80
  %v213 = vunpack.c.l.b16 %v81
  %v214 = vunpack.c.l.b16 %v82
  %v215 = vunpack.c.l.b16 %v83
  %v216 = vunpack.c.l.b16 %v84
  %v217 = vunpack.c.l.b16 %v85
  %v218 = vunpack.c.l.b16 %v86
  %v219 = vunpack.c.l.b16 %v87
  %v220 = vunpack.c.l.b16 %v88
  %v221 = vunpack.c.l.b16 %v89
  %v222 = vunpack.c.l.b16 %v90
  %v223 = vunpack.c.l.b16 %v91
  %v224 = vunpack.c.l.b16 %v92
  %v225 = vunpack.c.l.b16 %v93
  %v226 = vunpack.c.l.b16 %v94
  %v227 = vunpack.c.l.b16 %v95
  %v228 = vunpack.c.l.b16 %v96
  %v229 = vunpack.c.l.b16 %v97
  %v230 = vunpack.c.l.b16 %v98
  %v231 = vunpack.c.l.b16 %v99
  %v232 = vunpack.c.l.b16 %v100
  %v233 = vunpack.c.l.b16 %v101
  %v234 = vunpack.c.l.b16 %v102
  %v235 = vunpack.c.l.b16 %v103
  %v236 = vunpack.c.l.b16 %v104
  %v237 = vpack.c.b16 %v174, %v173
  %v238 = vpack.c.b16 %v176, %v175
  %v239 = vpack.c.b16 %v178, %v177
  %v240 = vpack.c.b16 %v180, %v179
  %v241 = vpack.c.b16 %v182, %v181
  %v242 = vpack.c.b16 %v184, %v183
  %v243 = vpack.c.b16 %v186, %v185
  %v244 = vpack.c.b16 %v188, %v187
  %v245 = vpack.c.b16 %v190, %v189
  %v246 = vpack.c.b16 %v192, %v191
  %v247 = vpack.c.b16 %v194, %v193
  %v248 = vpack.c.b16 %v196, %v195
  %v249 = vpack.c.b16 %v198, %v197
  %v250 = vpack.c.b16 %v200, %v199
  %v251 = vpack.c.b16 %v202, %v201
  %v252 = vpack.c.b16 %v204, %v203
  %v253 = vpack.c.b16 %v206, %v205
  %v254 = vpack.c.b16 %v208, %v207
  %v255 = vpack.c.b16 %v210, %v209
  %v256 = vpack.c.b16 %v212, %v211
  %v257 = vpack.c.b16 %v214, %v213
  %v258 = vpack.c.b16 %v216, %v215
  %v259 = vpack.c.b16 %v218, %v217
  %v260 = vpack.c.b16 %v220, %v219
  %v261 = vpack.c.b16 %v222, %v221
  %v262 = vpack.c.b16 %v224, %v223
  %v263 = vpack.c.b16 %v226, %v225
  %v264 = vpack.c.b16 %v228, %v227
  %v265 = vpack.c.b16 %v230, %v229
  %v266 = vpack.c.b16 %v232, %v231
  %v267 = vpack.c.b16 %v234, %v233
  %v268 = vpack.c.b16 %v236, %v235
  %vm269 = vcmask 293888
  %v271 = vsel %vm269, %v237, 0
  %v274 = vsel %vm269, %v238, 0
  %v277 = vsel %vm269, %v239, 0
  %v280 = vsel %vm269, %v240, 0
  %v283 = vsel %vm269, %v241, 0
  %v286 = vsel %vm269, %v242, 0
  %v289 = vsel %vm269, %v243, 0
  %v292 = vsel %vm269, %v244, 0
  %v295 = vsel %vm269, %v245, 0
  %v298 = vsel %vm269, %v246, 0
  %v301 = vsel %vm269, %v247, 0
  %v304 = vsel %vm269, %v248, 0
  %v307 = vsel %vm269, %v249, 0
  %v310 = vsel %vm269, %v250, 0
  %v313 = vsel %vm269, %v251, 0
  %v316 = vsel %vm269, %v252, 0
  %v319 = vsel %vm269, %v253, 0
  %v322 = vsel %vm269, %v254, 0
  %v325 = vsel %vm269, %v255, 0
  %v328 = vsel %vm269, %v256, 0
  %v331 = vsel %vm269, %v257, 0
  %v334 = vsel %vm269, %v258, 0
  %v337 = vsel %vm269, %v259, 0
  %v340 = vsel %vm269, %v260, 0
  %v343 = vsel %vm269, %v261, 0
  %v346 = vsel %vm269, %v262, 0
  %v349 = vsel %vm269, %v263, 0
  %v352 = vsel %vm269, %v264, 0
  %v355 = vsel %vm269, %v265, 0
  %v358 = vsel %vm269, %v266, 0
  %v361 = vsel %vm269, %v267, 0
  %v364 = vsel %vm269, %v268, 0
  %vm366 = vcmask 1041408
  %v368 = vsel %vm366, %v22, 0
  %370 = vmatprep.subr.bf16.mxu0 0
  %371 = vmatpush1.bf16.msra.mxu0 %v20
  %372 = vmatprep.subr.bf16.mxu0 0
  %373 = vmatpush1.bf16.msra.mxu0 %v21
  %374 = vmatprep.subr.bf16.mxu0 0
  %375 = vmatpush1.bf16.msra.mxu0 %v368
  %376 = vmatprep.subr.bf16.mxu0 0
  %377 = vmatpush1.bf16.msra.mxu0 0
  %378 = vmatprep.subr.bf16.mxu0 0
  %379 = vmatpush1.bf16.msra.mxu0 0
  %380 = vmatprep.subr.bf16.mxu0 0
  %381 = vmatpush1.bf16.msra.mxu0 0
  %382 = vmatprep.subr.bf16.mxu0 0
  %383 = vmatpush1.bf16.msra.mxu0 0
  %384 = vmatprep.subr.bf16.mxu0 0
  %385 = vmatpush1.bf16.msra.mxu0 0
  %386 = vmatprep.subr.bf16.mxu0 0
  %387 = vmatpush1.bf16.msra.mxu0 0
  %388 = vmatprep.subr.bf16.mxu0 0
  %389 = vmatpush1.bf16.msra.mxu0 0
  %390 = vmatprep.subr.bf16.mxu0 0
  %391 = vmatpush1.bf16.msra.mxu0 0
  %392 = vmatprep.subr.bf16.mxu0 0
  %393 = vmatpush1.bf16.msra.mxu0 0
  %394 = vmatprep.subr.bf16.mxu0 0
  %395 = vmatpush1.bf16.msra.mxu0 0
  %396 = vmatprep.subr.bf16.mxu0 0
  %397 = vmatpush1.bf16.msra.mxu0 0
  %398 = vmatprep.subr.bf16.mxu0 0
  %399 = vmatpush1.bf16.msra.mxu0 0
  %400 = vmatprep.subr.bf16.mxu0 0
  %401 = vmatpush1.bf16.msra.mxu0 0
  %402 = vmatprep.mubr.bf16.mxu0 0
  %403 = vmatmul.mubr.bf16.gmra.mrb[0].mxu0 %v271
  %v404 = vpop.f32.mrb[0].mxu0
  %v405 = vadd.f32 %v108, %v404
  %v406 = vpop.f32.mrb[0].mxu0
  %v407 = vpop.f32.mrb[0].mxu0
  %v408 = vadd.f32 %v108, %v407
  %v409 = vpop.f32.mrb[0].mxu0
  %410 = vmatprep.mubr.bf16.mxu0 0
  %411 = vmatmul.mubr.bf16.gmra.mrb[0].mxu0 %v274
  %v412 = vpop.f32.mrb[0].mxu0
  %v413 = vadd.f32 %v108, %v412
  %v414 = vpop.f32.mrb[0].mxu0
  %v415 = vpop.f32.mrb[0].mxu0
  %v416 = vadd.f32 %v108, %v415
  %v417 = vpop.f32.mrb[0].mxu0
  %418 = vmatprep.mubr.bf16.mxu0 0
  %419 = vmatmul.mubr.bf16.gmra.mrb[0].mxu0 %v277
  %v420 = vpop.f32.mrb[0].mxu0
  %v421 = vadd.f32 %v108, %v420
  %v422 = vpop.f32.mrb[0].mxu0
  %v423 = vpop.f32.mrb[0].mxu0
  %v424 = vadd.f32 %v108, %v423
  %v425 = vpop.f32.mrb[0].mxu0
  %426 = vmatprep.mubr.bf16.mxu0 0
  %427 = vmatmul.mubr.bf16.gmra.mrb[0].mxu0 %v280
  %v428 = vpop.f32.mrb[0].mxu0
  %v429 = vadd.f32 %v108, %v428
  %v430 = vpop.f32.mrb[0].mxu0
  %v431 = vpop.f32.mrb[0].mxu0
  %v432 = vadd.f32 %v108, %v431
  %v433 = vpop.f32.mrb[0].mxu0
  %434 = vmatprep.mubr.bf16.mxu0 0
  %435 = vmatmul.mubr.bf16.gmra.mrb[0].mxu0 %v283
  %v436 = vpop.f32.mrb[0].mxu0
  %v437 = vadd.f32 %v108, %v436
  %v438 = vpop.f32.mrb[0].mxu0
  %v439 = vpop.f32.mrb[0].mxu0
  %v440 = vadd.f32 %v108, %v439
  %v441 = vpop.f32.mrb[0].mxu0
  %442 = vmatprep.mubr.bf16.mxu0 0
  %443 = vmatmul.mubr.bf16.gmra.mrb[0].mxu0 %v286
  %v444 = vpop.f32.mrb[0].mxu0
  %v445 = vadd.f32 %v108, %v444
  %v446 = vpop.f32.mrb[0].mxu0
  %v447 = vpop.f32.mrb[0].mxu0
  %v448 = vadd.f32 %v108, %v447
  %v449 = vpop.f32.mrb[0].mxu0
  %450 = vmatprep.mubr.bf16.mxu0 0
  %451 = vmatmul.mubr.bf16.gmra.mrb[0].mxu0 %v289
  %v452 = vpop.f32.mrb[0].mxu0
  %v453 = vadd.f32 %v108, %v452
  %v454 = vpop.f32.mrb[0].mxu0
  %v455 = vpop.f32.mrb[0].mxu0
  %v456 = vadd.f32 %v108, %v455
  %v457 = vpop.f32.mrb[0].mxu0
  %458 = vmatprep.mubr.bf16.mxu0 0
  %459 = vmatmul.mubr.bf16.gmra.mrb[0].mxu0 %v292
  %v460 = vpop.f32.mrb[0].mxu0
  %v461 = vadd.f32 %v108, %v460
  %v462 = vpop.f32.mrb[0].mxu0
  %v463 = vpop.f32.mrb[0].mxu0
  %v464 = vadd.f32 %v108, %v463
  %v465 = vpop.f32.mrb[0].mxu0
  %466 = vmatprep.mubr.bf16.mxu0 0
  %467 = vmatmul.mubr.bf16.gmra.mrb[0].mxu0 %v295
  %v468 = vpop.f32.mrb[0].mxu0
  %v469 = vadd.f32 %v108, %v468
  %v470 = vpop.f32.mrb[0].mxu0
  %v471 = vpop.f32.mrb[0].mxu0
  %v472 = vadd.f32 %v108, %v471
  %v473 = vpop.f32.mrb[0].mxu0
  %474 = vmatprep.mubr.bf16.mxu0 0
  %475 = vmatmul.mubr.bf16.gmra.mrb[0].mxu0 %v298
  %v476 = vpop.f32.mrb[0].mxu0
  %v477 = vadd.f32 %v108, %v476
  %v478 = vpop.f32.mrb[0].mxu0
  %v479 = vpop.f32.mrb[0].mxu0
  %v480 = vadd.f32 %v108, %v479
  %v481 = vpop.f32.mrb[0].mxu0
  %482 = vmatprep.mubr.bf16.mxu0 0
  %483 = vmatmul.mubr.bf16.gmra.mrb[0].mxu0 %v301
  %v484 = vpop.f32.mrb[0].mxu0
  %v485 = vadd.f32 %v108, %v484
  %v486 = vpop.f32.mrb[0].mxu0
  %v487 = vpop.f32.mrb[0].mxu0
  %v488 = vadd.f32 %v108, %v487
  %v489 = vpop.f32.mrb[0].mxu0
  %490 = vmatprep.mubr.bf16.mxu0 0
  %491 = vmatmul.mubr.bf16.gmra.mrb[0].mxu0 %v304
  %v492 = vpop.f32.mrb[0].mxu0
  %v493 = vadd.f32 %v108, %v492
  %v494 = vpop.f32.mrb[0].mxu0
  %v495 = vpop.f32.mrb[0].mxu0
  %v496 = vadd.f32 %v108, %v495
  %v497 = vpop.f32.mrb[0].mxu0
  %498 = vmatprep.mubr.bf16.mxu0 0
  %499 = vmatmul.mubr.bf16.gmra.mrb[0].mxu0 %v307
  %v500 = vpop.f32.mrb[0].mxu0
  %v501 = vadd.f32 %v108, %v500
  %v502 = vpop.f32.mrb[0].mxu0
  %v503 = vpop.f32.mrb[0].mxu0
  %v504 = vadd.f32 %v108, %v503
  %v505 = vpop.f32.mrb[0].mxu0
  %506 = vmatprep.mubr.bf16.mxu0 0
  %507 = vmatmul.mubr.bf16.gmra.mrb[0].mxu0 %v310
  %v508 = vpop.f32.mrb[0].mxu0
  %v509 = vadd.f32 %v108, %v508
  %v510 = vpop.f32.mrb[0].mxu0
  %v511 = vpop.f32.mrb[0].mxu0
  %v512 = vadd.f32 %v108, %v511
  %v513 = vpop.f32.mrb[0].mxu0
  %514 = vmatprep.mubr.bf16.mxu0 0
  %515 = vmatmul.mubr.bf16.gmra.mrb[0].mxu0 %v313
  %v516 = vpop.f32.mrb[0].mxu0
  %v517 = vadd.f32 %v108, %v516
  %v518 = vpop.f32.mrb[0].mxu0
  %v519 = vpop.f32.mrb[0].mxu0
  %v520 = vadd.f32 %v108, %v519
  %v521 = vpop.f32.mrb[0].mxu0
  %522 = vmatprep.mubr.bf16.mxu0 0
  %523 = vmatmul.mubr.bf16.gmra.mrb[0].mxu0 %v316
  %v524 = vpop.f32.mrb[0].mxu0
  %v525 = vadd.f32 %v108, %v524
  %v526 = vpop.f32.mrb[0].mxu0
  %v527 = vpop.f32.mrb[0].mxu0
  %v528 = vadd.f32 %v108, %v527
  %v529 = vpop.f32.mrb[0].mxu0
  %530 = vmatprep.mubr.bf16.mxu0 0
  %531 = vmatmul.mubr.bf16.gmra.mrb[0].mxu0 %v319
  %v532 = vpop.f32.mrb[0].mxu0
  %v533 = vadd.f32 %v108, %v532
  %v534 = vpop.f32.mrb[0].mxu0
  %v535 = vpop.f32.mrb[0].mxu0
  %v536 = vadd.f32 %v108, %v535
  %v537 = vpop.f32.mrb[0].mxu0
  %538 = vmatprep.mubr.bf16.mxu0 0
  %539 = vmatmul.mubr.bf16.gmra.mrb[0].mxu0 %v322
  %v540 = vpop.f32.mrb[0].mxu0
  %v541 = vadd.f32 %v108, %v540
  %v542 = vpop.f32.mrb[0].mxu0
  %v543 = vpop.f32.mrb[0].mxu0
  %v544 = vadd.f32 %v108, %v543
  %v545 = vpop.f32.mrb[0].mxu0
  %546 = vmatprep.mubr.bf16.mxu0 0
  %547 = vmatmul.mubr.bf16.gmra.mrb[0].mxu0 %v325
  %v548 = vpop.f32.mrb[0].mxu0
  %v549 = vadd.f32 %v108, %v548
  %v550 = vpop.f32.mrb[0].mxu0
  %v551 = vpop.f32.mrb[0].mxu0
  %v552 = vadd.f32 %v108, %v551
  %v553 = vpop.f32.mrb[0].mxu0
  %554 = vmatprep.mubr.bf16.mxu0 0
  %555 = vmatmul.mubr.bf16.gmra.mrb[0].mxu0 %v328
  %v556 = vpop.f32.mrb[0].mxu0
  %v557 = vadd.f32 %v108, %v556
  %v558 = vpop.f32.mrb[0].mxu0
  %v559 = vpop.f32.mrb[0].mxu0
  %v560 = vadd.f32 %v108, %v559
  %v561 = vpop.f32.mrb[0].mxu0
  %562 = vmatprep.mubr.bf16.mxu0 0
  %563 = vmatmul.mubr.bf16.gmra.mrb[0].mxu0 %v331
  %v564 = vpop.f32.mrb[0].mxu0
  %v565 = vadd.f32 %v108, %v564
  %v566 = vpop.f32.mrb[0].mxu0
  %v567 = vpop.f32.mrb[0].mxu0
  %v568 = vadd.f32 %v108, %v567
  %v569 = vpop.f32.mrb[0].mxu0
  %570 = vmatprep.mubr.bf16.mxu0 0
  %571 = vmatmul.mubr.bf16.gmra.mrb[0].mxu0 %v334
  %v572 = vpop.f32.mrb[0].mxu0
  %v573 = vadd.f32 %v108, %v572
  %v574 = vpop.f32.mrb[0].mxu0
  %v575 = vpop.f32.mrb[0].mxu0
  %v576 = vadd.f32 %v108, %v575
  %v577 = vpop.f32.mrb[0].mxu0
  %578 = vmatprep.mubr.bf16.mxu0 0
  %579 = vmatmul.mubr.bf16.gmra.mrb[0].mxu0 %v337
  %v580 = vpop.f32.mrb[0].mxu0
  %v581 = vadd.f32 %v108, %v580
  %v582 = vpop.f32.mrb[0].mxu0
  %v583 = vpop.f32.mrb[0].mxu0
  %v584 = vadd.f32 %v108, %v583
  %v585 = vpop.f32.mrb[0].mxu0
  %586 = vmatprep.mubr.bf16.mxu0 0
  %587 = vmatmul.mubr.bf16.gmra.mrb[0].mxu0 %v340
  %v588 = vpop.f32.mrb[0].mxu0
  %v589 = vadd.f32 %v108, %v588
  %v590 = vpop.f32.mrb[0].mxu0
  %v591 = vpop.f32.mrb[0].mxu0
  %v592 = vadd.f32 %v108, %v591
  %v593 = vpop.f32.mrb[0].mxu0
  %594 = vmatprep.mubr.bf16.mxu0 0
  %595 = vmatmul.mubr.bf16.gmra.mrb[0].mxu0 %v343
  %v596 = vpop.f32.mrb[0].mxu0
  %v597 = vadd.f32 %v108, %v596
  %v598 = vpop.f32.mrb[0].mxu0
  %v599 = vpop.f32.mrb[0].mxu0
  %v600 = vadd.f32 %v108, %v599
  %v601 = vpop.f32.mrb[0].mxu0
  %602 = vmatprep.mubr.bf16.mxu0 0
  %603 = vmatmul.mubr.bf16.gmra.mrb[0].mxu0 %v346
  %v604 = vpop.f32.mrb[0].mxu0
  %v605 = vadd.f32 %v108, %v604
  %v606 = vpop.f32.mrb[0].mxu0
  %v607 = vpop.f32.mrb[0].mxu0
  %v608 = vadd.f32 %v108, %v607
  %v609 = vpop.f32.mrb[0].mxu0
  %610 = vmatprep.mubr.bf16.mxu0 0
  %611 = vmatmul.mubr.bf16.gmra.mrb[0].mxu0 %v349
  %v612 = vpop.f32.mrb[0].mxu0
  %v613 = vadd.f32 %v108, %v612
  %v614 = vpop.f32.mrb[0].mxu0
  %v615 = vpop.f32.mrb[0].mxu0
  %v616 = vadd.f32 %v108, %v615
  %v617 = vpop.f32.mrb[0].mxu0
  %618 = vmatprep.mubr.bf16.mxu0 0
  %619 = vmatmul.mubr.bf16.gmra.mrb[0].mxu0 %v352
  %v620 = vpop.f32.mrb[0].mxu0
  %v621 = vadd.f32 %v108, %v620
  %v622 = vpop.f32.mrb[0].mxu0
  %v623 = vpop.f32.mrb[0].mxu0
  %v624 = vadd.f32 %v108, %v623
  %v625 = vpop.f32.mrb[0].mxu0
  %626 = vmatprep.mubr.bf16.mxu0 0
  %627 = vmatmul.mubr.bf16.gmra.mrb[0].mxu0 %v355
  %v628 = vpop.f32.mrb[0].mxu0
  %v629 = vadd.f32 %v108, %v628
  %v630 = vpop.f32.mrb[0].mxu0
  %v631 = vpop.f32.mrb[0].mxu0
  %v632 = vadd.f32 %v108, %v631
  %v633 = vpop.f32.mrb[0].mxu0
  %634 = vmatprep.mubr.bf16.mxu0 0
  %635 = vmatmul.mubr.bf16.gmra.mrb[0].mxu0 %v358
  %v636 = vpop.f32.mrb[0].mxu0
  %v637 = vadd.f32 %v108, %v636
  %v638 = vpop.f32.mrb[0].mxu0
  %v639 = vpop.f32.mrb[0].mxu0
  %v640 = vadd.f32 %v108, %v639
  %v641 = vpop.f32.mrb[0].mxu0
  %642 = vmatprep.mubr.bf16.mxu0 0
  %643 = vmatmul.mubr.bf16.gmra.mrb[0].mxu0 %v361
  %v644 = vpop.f32.mrb[0].mxu0
  %v645 = vadd.f32 %v108, %v644
  %v646 = vpop.f32.mrb[0].mxu0
  %v647 = vpop.f32.mrb[0].mxu0
  %v648 = vadd.f32 %v108, %v647
  %v649 = vpop.f32.mrb[0].mxu0
  %650 = vmatprep.mubr.bf16.mxu0 0
  %651 = vmatmul.mubr.bf16.gmra.mrb[0].mxu0 %v364
  %v652 = vpop.f32.mrb[0].mxu0
  %v653 = vadd.f32 %v108, %v652
  %v654 = vpop.f32.mrb[0].mxu0
  %v655 = vpop.f32.mrb[0].mxu0
  %v656 = vadd.f32 %v108, %v655
  %v657 = vpop.f32.mrb[0].mxu0
  %658 = vdwg.mxu0
  %v659 = vmax.f32 %v405, 0.0
  %v660 = vmax.f32 %v408, 0.0
  %v661 = vmax.f32 %v413, 0.0
  %v662 = vmax.f32 %v416, 0.0
  %v663 = vmax.f32 %v421, 0.0
  %v664 = vmax.f32 %v424, 0.0
  %v665 = vmax.f32 %v429, 0.0
  %v666 = vmax.f32 %v432, 0.0
  %v667 = vmax.f32 %v437, 0.0
  %v668 = vmax.f32 %v440, 0.0
  %v669 = vmax.f32 %v445, 0.0
  %v670 = vmax.f32 %v448, 0.0
  %v671 = vmax.f32 %v453, 0.0
  %v672 = vmax.f32 %v456, 0.0
  %v673 = vmax.f32 %v461, 0.0
  %v674 = vmax.f32 %v464, 0.0
  %v675 = vmax.f32 %v469, 0.0
  %v676 = vmax.f32 %v472, 0.0
  %v677 = vmax.f32 %v477, 0.0
  %v678 = vmax.f32 %v480, 0.0
  %v679 = vmax.f32 %v485, 0.0
  %v680 = vmax.f32 %v488, 0.0
  %v681 = vmax.f32 %v493, 0.0
  %v682 = vmax.f32 %v496, 0.0
  %v683 = vmax.f32 %v501, 0.0
  %v684 = vmax.f32 %v504, 0.0
  %v685 = vmax.f32 %v509, 0.0
  %v686 = vmax.f32 %v512, 0.0
  %v687 = vmax.f32 %v517, 0.0
  %v688 = vmax.f32 %v520, 0.0
  %v689 = vmax.f32 %v525, 0.0
  %v690 = vmax.f32 %v528, 0.0
  %v691 = vmax.f32 %v533, 0.0
  %v692 = vmax.f32 %v536, 0.0
  %v693 = vmax.f32 %v541, 0.0
  %v694 = vmax.f32 %v544, 0.0
  %v695 = vmax.f32 %v549, 0.0
  %v696 = vmax.f32 %v552, 0.0
  %v697 = vmax.f32 %v557, 0.0
  %v698 = vmax.f32 %v560, 0.0
  %v699 = vmax.f32 %v565, 0.0
  %v700 = vmax.f32 %v568, 0.0
  %v701 = vmax.f32 %v573, 0.0
  %v702 = vmax.f32 %v576, 0.0
  %v703 = vmax.f32 %v581, 0.0
  %v704 = vmax.f32 %v584, 0.0
  %v705 = vmax.f32 %v589, 0.0
  %v706 = vmax.f32 %v592, 0.0
  %v707 = vmax.f32 %v597, 0.0
  %v708 = vmax.f32 %v600, 0.0
  %v709 = vmax.f32 %v605, 0.0
  %v710 = vmax.f32 %v608, 0.0
  %v711 = vmax.f32 %v613, 0.0
  %v712 = vmax.f32 %v616, 0.0
  %v713 = vmax.f32 %v621, 0.0
  %v714 = vmax.f32 %v624, 0.0
  %v715 = vmax.f32 %v629, 0.0
  %v716 = vmax.f32 %v632, 0.0
  %v717 = vmax.f32 %v637, 0.0
  %v718 = vmax.f32 %v640, 0.0
  %v719 = vmax.f32 %v645, 0.0
  %v720 = vmax.f32 %v648, 0.0
  %v721 = vmax.f32 %v653, 0.0
  %v722 = vmax.f32 %v656, 0.0
  %v723 = vlaneseq
  %v724 = vshrl.u32 %v723, 7
  %v725 = vlaneseq
  %v726 = vand.u32 %v725, 127
  %v727 = vadd.s32 %v726, 128
  %v728 = vadd.s32 %v726, 256
  %v729 = vadd.s32 %v726, 384
  %v730 = vmul.u32 %v724, 256
  %vm731 = vcmp.ge.s32.totalorder %v726, %v730
  %vm732 = vcmp.ge.s32.totalorder %v727, %v730
  %vm733 = vcmp.ge.s32.totalorder %v728, %v730
  %vm734 = vcmp.ge.s32.totalorder %v729, %v730
  %v735 = vadd.s32 %v730, 256
  %vm736 = vcmp.lt.s32.totalorder %v726, %v735
  %vm737 = vcmp.lt.s32.totalorder %v727, %v735
  %vm738 = vcmp.lt.s32.totalorder %v728, %v735
  %vm739 = vcmp.lt.s32.totalorder %v729, %v735
  %vm740 = vmand %vm731, %vm736
  %vm741 = vmand %vm732, %vm737
  %vm742 = vmand %vm733, %vm738
  %vm743 = vmand %vm734, %vm739
  %v744 = vsel %vm740, 0.00390625, 0.0
  %v745 = vsel %vm741, 0.00390625, 0.0
  %v746 = vsel %vm742, 0.00390625, 0.0
  %v747 = vsel %vm743, 0.00390625, 0.0
  %748 = vmatprep.subr.mxu0 0.0
  %749 = vmatpush1.msra.mxu0 %v659
  %750 = vmatprep.subr.mxu0 0.0
  %751 = vmatpush1.msra.mxu0 %v660
  %752 = vmatprep.subr.mxu0 0.0
  %753 = vmatpush1.msra.mxu0 %v661
  %754 = vmatprep.subr.mxu0 0.0
  %755 = vmatpush1.msra.mxu0 %v662
  %756 = vmatprep.subr.mxu0 0.0
  %757 = vmatpush1.msra.mxu0 %v663
  %758 = vmatprep.subr.mxu0 0.0
  %759 = vmatpush1.msra.mxu0 %v664
  %760 = vmatprep.subr.mxu0 0.0
  %761 = vmatpush1.msra.mxu0 %v665
  %762 = vmatprep.subr.mxu0 0.0
  %763 = vmatpush1.msra.mxu0 %v666
  %764 = vmatprep.subr.mxu0 0.0
  %765 = vmatpush1.msra.mxu0 %v667
  %766 = vmatprep.subr.mxu0 0.0
  %767 = vmatpush1.msra.mxu0 %v668
  %768 = vmatprep.subr.mxu0 0.0
  %769 = vmatpush1.msra.mxu0 %v669
  %770 = vmatprep.subr.mxu0 0.0
  %771 = vmatpush1.msra.mxu0 %v670
  %772 = vmatprep.subr.mxu0 0.0
  %773 = vmatpush1.msra.mxu0 %v671
  %774 = vmatprep.subr.mxu0 0.0
  %775 = vmatpush1.msra.mxu0 %v672
  %776 = vmatprep.subr.mxu0 0.0
  %777 = vmatpush1.msra.mxu0 %v673
  %778 = vmatprep.subr.mxu0 0.0
  %779 = vmatpush1.msra.mxu0 %v674
  %780 = vmatprep.subr.mxu0 0.0
  %781 = vmatpush1.msra.mxu0 %v675
  %782 = vmatprep.subr.mxu0 0.0
  %783 = vmatpush1.msra.mxu0 %v676
  %784 = vmatprep.subr.mxu0 0.0
  %785 = vmatpush1.msra.mxu0 %v677
  %786 = vmatprep.subr.mxu0 0.0
  %787 = vmatpush1.msra.mxu0 %v678
  %788 = vmatprep.subr.mxu0 0.0
  %789 = vmatpush1.msra.mxu0 %v679
  %790 = vmatprep.subr.mxu0 0.0
  %791 = vmatpush1.msra.mxu0 %v680
  %792 = vmatprep.subr.mxu0 0.0
  %793 = vmatpush1.msra.mxu0 %v681
  %794 = vmatprep.subr.mxu0 0.0
  %795 = vmatpush1.msra.mxu0 %v682
  %796 = vmatprep.subr.mxu0 0.0
  %797 = vmatpush1.msra.mxu0 %v683
  %798 = vmatprep.subr.mxu0 0.0
  %799 = vmatpush1.msra.mxu0 %v684
  %800 = vmatprep.subr.mxu0 0.0
  %801 = vmatpush1.msra.mxu0 %v685
  %802 = vmatprep.subr.mxu0 0.0
  %803 = vmatpush1.msra.mxu0 %v686
  %804 = vmatprep.subr.mxu0 0.0
  %805 = vmatpush1.msra.mxu0 %v687
  %806 = vmatprep.subr.mxu0 0.0
  %807 = vmatpush1.msra.mxu0 %v688
  %808 = vmatprep.subr.mxu0 0.0
  %809 = vmatpush1.msra.mxu0 %v689
  %810 = vmatprep.subr.mxu0 0.0
  %811 = vmatpush1.msra.mxu0 %v690
  %812 = vmatprep.mubr.f32.mxu0 %v745
  %813 = vmatmul.mubr.f32.gmra.mrb[0].mxu0 %v744
  %v814 = vpop.f32.mrb[0].mxu0
  %v815 = vadd.f32 0.0, %v814
  %v816 = vpop.f32.mrb[0].mxu0
  %817 = vdwg.mxu0
  %818 = vmatprep.subr.mxu0 0.0
  %819 = vmatpush1.msra.mxu0 %v691
  %820 = vmatprep.subr.mxu0 0.0
  %821 = vmatpush1.msra.mxu0 %v692
  %822 = vmatprep.subr.mxu0 0.0
  %823 = vmatpush1.msra.mxu0 %v693
  %824 = vmatprep.subr.mxu0 0.0
  %825 = vmatpush1.msra.mxu0 %v694
  %826 = vmatprep.subr.mxu0 0.0
  %827 = vmatpush1.msra.mxu0 %v695
  %828 = vmatprep.subr.mxu0 0.0
  %829 = vmatpush1.msra.mxu0 %v696
  %830 = vmatprep.subr.mxu0 0.0
  %831 = vmatpush1.msra.mxu0 %v697
  %832 = vmatprep.subr.mxu0 0.0
  %833 = vmatpush1.msra.mxu0 %v698
  %834 = vmatprep.subr.mxu0 0.0
  %835 = vmatpush1.msra.mxu0 %v699
  %836 = vmatprep.subr.mxu0 0.0
  %837 = vmatpush1.msra.mxu0 %v700
  %838 = vmatprep.subr.mxu0 0.0
  %839 = vmatpush1.msra.mxu0 %v701
  %840 = vmatprep.subr.mxu0 0.0
  %841 = vmatpush1.msra.mxu0 %v702
  %842 = vmatprep.subr.mxu0 0.0
  %843 = vmatpush1.msra.mxu0 %v703
  %844 = vmatprep.subr.mxu0 0.0
  %845 = vmatpush1.msra.mxu0 %v704
  %846 = vmatprep.subr.mxu0 0.0
  %847 = vmatpush1.msra.mxu0 %v705
  %848 = vmatprep.subr.mxu0 0.0
  %849 = vmatpush1.msra.mxu0 %v706
  %850 = vmatprep.subr.mxu0 0.0
  %851 = vmatpush1.msra.mxu0 %v707
  %852 = vmatprep.subr.mxu0 0.0
  %853 = vmatpush1.msra.mxu0 %v708
  %854 = vmatprep.subr.mxu0 0.0
  %855 = vmatpush1.msra.mxu0 %v709
  %856 = vmatprep.subr.mxu0 0.0
  %857 = vmatpush1.msra.mxu0 %v710
  %858 = vmatprep.subr.mxu0 0.0
  %859 = vmatpush1.msra.mxu0 %v711
  %860 = vmatprep.subr.mxu0 0.0
  %861 = vmatpush1.msra.mxu0 %v712
  %862 = vmatprep.subr.mxu0 0.0
  %863 = vmatpush1.msra.mxu0 %v713
  %864 = vmatprep.subr.mxu0 0.0
  %865 = vmatpush1.msra.mxu0 %v714
  %866 = vmatprep.subr.mxu0 0.0
  %867 = vmatpush1.msra.mxu0 %v715
  %868 = vmatprep.subr.mxu0 0.0
  %869 = vmatpush1.msra.mxu0 %v716
  %870 = vmatprep.subr.mxu0 0.0
  %871 = vmatpush1.msra.mxu0 %v717
  %872 = vmatprep.subr.mxu0 0.0
  %873 = vmatpush1.msra.mxu0 %v718
  %874 = vmatprep.subr.mxu0 0.0
  %875 = vmatpush1.msra.mxu0 %v719
  %876 = vmatprep.subr.mxu0 0.0
  %877 = vmatpush1.msra.mxu0 %v720
  %878 = vmatprep.subr.mxu0 0.0
  %879 = vmatpush1.msra.mxu0 %v721
  %880 = vmatprep.subr.mxu0 0.0
  %881 = vmatpush1.msra.mxu0 %v722
  %882 = vmatprep.mubr.f32.mxu0 %v747
  %883 = vmatmul.mubr.f32.gmra.mrb[0].mxu0 %v746
  %v884 = vpop.f32.mrb[0].mxu0
  %v885 = vadd.f32 %v815, %v884
  %v886 = vpop.f32.mrb[0].mxu0
  %887 = vdwg.mxu0
  %v888 = vlaneseq
  %v889 = vshrl.u32 %v888, 7
  %v890 = vsub.s32 0, %v889
  %v891 = vrot.slane %v26, %v890
  %vm892 = vcmask 130048
  %v894 = vsel %vm892, %v885, 0
  %896 = vmatprep.subr.mxu0 0.0
  %897 = vmatpush1.msra.mxu0 %v24
  %898 = vmatprep.subr.mxu0 0.0
  %899 = vmatpush1.msra.mxu0 %v25
  %900 = vmatprep.subr.mxu0 0.0
  %901 = vmatpush1.msra.mxu0 0.0
  %902 = vmatprep.subr.mxu0 0.0
  %903 = vmatpush1.msra.mxu0 0.0
  %904 = vmatprep.subr.mxu0 0.0
  %905 = vmatpush1.msra.mxu0 0.0
  %906 = vmatprep.subr.mxu0 0.0
  %907 = vmatpush1.msra.mxu0 0.0
  %908 = vmatprep.subr.mxu0 0.0
  %909 = vmatpush1.msra.mxu0 0.0
  %910 = vmatprep.subr.mxu0 0.0
  %911 = vmatpush1.msra.mxu0 0.0
  %912 = vmatprep.subr.mxu0 0.0
  %913 = vmatpush1.msra.mxu0 0.0
  %914 = vmatprep.subr.mxu0 0.0
  %915 = vmatpush1.msra.mxu0 0.0
  %916 = vmatprep.subr.mxu0 0.0
  %917 = vmatpush1.msra.mxu0 0.0
  %918 = vmatprep.subr.mxu0 0.0
  %919 = vmatpush1.msra.mxu0 0.0
  %920 = vmatprep.subr.mxu0 0.0
  %921 = vmatpush1.msra.mxu0 0.0
  %922 = vmatprep.subr.mxu0 0.0
  %923 = vmatpush1.msra.mxu0 0.0
  %924 = vmatprep.subr.mxu0 0.0
  %925 = vmatpush1.msra.mxu0 0.0
  %926 = vmatprep.subr.mxu0 0.0
  %927 = vmatpush1.msra.mxu0 0.0
  %928 = vmatprep.subr.mxu0 0.0
  %929 = vmatpush1.msra.mxu0 0.0
  %930 = vmatprep.subr.mxu0 0.0
  %931 = vmatpush1.msra.mxu0 0.0
  %932 = vmatprep.subr.mxu0 0.0
  %933 = vmatpush1.msra.mxu0 0.0
  %934 = vmatprep.subr.mxu0 0.0
  %935 = vmatpush1.msra.mxu0 0.0
  %936 = vmatprep.subr.mxu0 0.0
  %937 = vmatpush1.msra.mxu0 0.0
  %938 = vmatprep.subr.mxu0 0.0
  %939 = vmatpush1.msra.mxu0 0.0
  %940 = vmatprep.subr.mxu0 0.0
  %941 = vmatpush1.msra.mxu0 0.0
  %942 = vmatprep.subr.mxu0 0.0
  %943 = vmatpush1.msra.mxu0 0.0
  %944 = vmatprep.subr.mxu0 0.0
  %945 = vmatpush1.msra.mxu0 0.0
  %946 = vmatprep.subr.mxu0 0.0
  %947 = vmatpush1.msra.mxu0 0.0
  %948 = vmatprep.subr.mxu0 0.0
  %949 = vmatpush1.msra.mxu0 0.0
  %950 = vmatprep.subr.mxu0 0.0
  %951 = vmatpush1.msra.mxu0 0.0
  %952 = vmatprep.subr.mxu0 0.0
  %953 = vmatpush1.msra.mxu0 0.0
  %954 = vmatprep.subr.mxu0 0.0
  %955 = vmatpush1.msra.mxu0 0.0
  %956 = vmatprep.subr.mxu0 0.0
  %957 = vmatpush1.msra.mxu0 0.0
  %958 = vmatprep.subr.mxu0 0.0
  %959 = vmatpush1.msra.mxu0 0.0
  %960 = vmatprep.mubr.f32.mxu0 0.0
  %961 = vmatmul.mubr.f32.gmra.mrb[0].mxu0 %v894
  %v962 = vpop.f32.mrb[0].mxu0
  %v963 = vadd.f32 %v891, %v962
  %v964 = vpop.f32.mrb[0].mxu0
  %965 = vdwg.mxu0
  %v966 = vld [vmem:[%s1] sm:$0xff]
  %v967 = vld [vmem:[%s1 + $0x8] sm:$0xff]
  %v968 = vlaneseq
  %v969 = vshrl.u32 %v968, 7
  %v970 = vsub.s32 0, %v969
  %v971 = vrot.slane %v39, %v970
  %vm972 = vcmask 261120
  %v974 = vsel %vm972, %v966, 0
  %v977 = vsel %vm972, %v967, 0
  %979 = vmatprep.subr.mxu0 0.0
  %980 = vmatpush1.msra.mxu0 %v27
  %981 = vmatprep.subr.mxu0 0.0
  %982 = vmatpush1.msra.mxu0 %v28
  %983 = vmatprep.subr.mxu0 0.0
  %984 = vmatpush1.msra.mxu0 %v29
  %985 = vmatprep.subr.mxu0 0.0
  %986 = vmatpush1.msra.mxu0 %v30
  %987 = vmatprep.subr.mxu0 0.0
  %988 = vmatpush1.msra.mxu0 0.0
  %989 = vmatprep.subr.mxu0 0.0
  %990 = vmatpush1.msra.mxu0 0.0
  %991 = vmatprep.subr.mxu0 0.0
  %992 = vmatpush1.msra.mxu0 0.0
  %993 = vmatprep.subr.mxu0 0.0
  %994 = vmatpush1.msra.mxu0 0.0
  %995 = vmatprep.subr.mxu0 0.0
  %996 = vmatpush1.msra.mxu0 0.0
  %997 = vmatprep.subr.mxu0 0.0
  %998 = vmatpush1.msra.mxu0 0.0
  %999 = vmatprep.subr.mxu0 0.0
  %1000 = vmatpush1.msra.mxu0 0.0
  %1001 = vmatprep.subr.mxu0 0.0
  %1002 = vmatpush1.msra.mxu0 0.0
  %1003 = vmatprep.subr.mxu0 0.0
  %1004 = vmatpush1.msra.mxu0 0.0
  %1005 = vmatprep.subr.mxu0 0.0
  %1006 = vmatpush1.msra.mxu0 0.0
  %1007 = vmatprep.subr.mxu0 0.0
  %1008 = vmatpush1.msra.mxu0 0.0
  %1009 = vmatprep.subr.mxu0 0.0
  %1010 = vmatpush1.msra.mxu0 0.0
  %1011 = vmatprep.subr.mxu0 0.0
  %1012 = vmatpush1.msra.mxu0 0.0
  %1013 = vmatprep.subr.mxu0 0.0
  %1014 = vmatpush1.msra.mxu0 0.0
  %1015 = vmatprep.subr.mxu0 0.0
  %1016 = vmatpush1.msra.mxu0 0.0
  %1017 = vmatprep.subr.mxu0 0.0
  %1018 = vmatpush1.msra.mxu0 0.0
  %1019 = vmatprep.subr.mxu0 0.0
  %1020 = vmatpush1.msra.mxu0 0.0
  %1021 = vmatprep.subr.mxu0 0.0
  %1022 = vmatpush1.msra.mxu0 0.0
  %1023 = vmatprep.subr.mxu0 0.0
  %1024 = vmatpush1.msra.mxu0 0.0
  %1025 = vmatprep.subr.mxu0 0.0
  %1026 = vmatpush1.msra.mxu0 0.0
  %1027 = vmatprep.subr.mxu0 0.0
  %1028 = vmatpush1.msra.mxu0 0.0
  %1029 = vmatprep.subr.mxu0 0.0
  %1030 = vmatpush1.msra.mxu0 0.0
  %1031 = vmatprep.subr.mxu0 0.0
  %1032 = vmatpush1.msra.mxu0 0.0
  %1033 = vmatprep.subr.mxu0 0.0
  %1034 = vmatpush1.msra.mxu0 0.0
  %1035 = vmatprep.subr.mxu0 0.0
  %1036 = vmatpush1.msra.mxu0 0.0
  %1037 = vmatprep.subr.mxu0 0.0
  %1038 = vmatpush1.msra.mxu0 0.0
  %1039 = vmatprep.subr.mxu0 0.0
  %1040 = vmatpush1.msra.mxu0 0.0
  %1041 = vmatprep.subr.mxu0 0.0
  %1042 = vmatpush1.msra.mxu0 0.0
  %1043 = vmatprep.mubr.f32.mxu0 0.0
  %1044 = vmatmul.mubr.f32.gmra.mrb[0].mxu0 %v974
  %v1045 = vpop.f32.mrb[0].mxu0
  %v1046 = vadd.f32 %v971, %v1045
  %v1047 = vpop.f32.mrb[0].mxu0
  %1048 = vmatprep.mubr.f32.mxu0 0.0
  %1049 = vmatmul.mubr.f32.gmra.mrb[0].mxu0 %v977
  %v1050 = vpop.f32.mrb[0].mxu0
  %v1051 = vadd.f32 %v971, %v1050
  %v1052 = vpop.f32.mrb[0].mxu0
  %1053 = vdwg.mxu0
  %v1055 = vsel %vm972, %v963, 0
  %1057 = vmatprep.subr.mxu0 0.0
  %1058 = vmatpush1.msra.mxu0 %v27
  %1059 = vmatprep.subr.mxu0 0.0
  %1060 = vmatpush1.msra.mxu0 %v28
  %1061 = vmatprep.subr.mxu0 0.0
  %1062 = vmatpush1.msra.mxu0 %v29
  %1063 = vmatprep.subr.mxu0 0.0
  %1064 = vmatpush1.msra.mxu0 %v30
  %1065 = vmatprep.subr.mxu0 0.0
  %1066 = vmatpush1.msra.mxu0 0.0
  %1067 = vmatprep.subr.mxu0 0.0
  %1068 = vmatpush1.msra.mxu0 0.0
  %1069 = vmatprep.subr.mxu0 0.0
  %1070 = vmatpush1.msra.mxu0 0.0
  %1071 = vmatprep.subr.mxu0 0.0
  %1072 = vmatpush1.msra.mxu0 0.0
  %1073 = vmatprep.subr.mxu0 0.0
  %1074 = vmatpush1.msra.mxu0 0.0
  %1075 = vmatprep.subr.mxu0 0.0
  %1076 = vmatpush1.msra.mxu0 0.0
  %1077 = vmatprep.subr.mxu0 0.0
  %1078 = vmatpush1.msra.mxu0 0.0
  %1079 = vmatprep.subr.mxu0 0.0
  %1080 = vmatpush1.msra.mxu0 0.0
  %1081 = vmatprep.subr.mxu0 0.0
  %1082 = vmatpush1.msra.mxu0 0.0
  %1083 = vmatprep.subr.mxu0 0.0
  %1084 = vmatpush1.msra.mxu0 0.0
  %1085 = vmatprep.subr.mxu0 0.0
  %1086 = vmatpush1.msra.mxu0 0.0
  %1087 = vmatprep.subr.mxu0 0.0
  %1088 = vmatpush1.msra.mxu0 0.0
  %1089 = vmatprep.subr.mxu0 0.0
  %1090 = vmatpush1.msra.mxu0 0.0
  %1091 = vmatprep.subr.mxu0 0.0
  %1092 = vmatpush1.msra.mxu0 0.0
  %1093 = vmatprep.subr.mxu0 0.0
  %1094 = vmatpush1.msra.mxu0 0.0
  %1095 = vmatprep.subr.mxu0 0.0
  %1096 = vmatpush1.msra.mxu0 0.0
  %1097 = vmatprep.subr.mxu0 0.0
  %1098 = vmatpush1.msra.mxu0 0.0
  %1099 = vmatprep.subr.mxu0 0.0
  %1100 = vmatpush1.msra.mxu0 0.0
  %1101 = vmatprep.subr.mxu0 0.0
  %1102 = vmatpush1.msra.mxu0 0.0
  %1103 = vmatprep.subr.mxu0 0.0
  %1104 = vmatpush1.msra.mxu0 0.0
  %1105 = vmatprep.subr.mxu0 0.0
  %1106 = vmatpush1.msra.mxu0 0.0
  %1107 = vmatprep.subr.mxu0 0.0
  %1108 = vmatpush1.msra.mxu0 0.0
  %1109 = vmatprep.subr.mxu0 0.0
  %1110 = vmatpush1.msra.mxu0 0.0
  %1111 = vmatprep.subr.mxu0 0.0
  %1112 = vmatpush1.msra.mxu0 0.0
  %1113 = vmatprep.subr.mxu0 0.0
  %1114 = vmatpush1.msra.mxu0 0.0
  %1115 = vmatprep.subr.mxu0 0.0
  %1116 = vmatpush1.msra.mxu0 0.0
  %1117 = vmatprep.subr.mxu0 0.0
  %1118 = vmatpush1.msra.mxu0 0.0
  %1119 = vmatprep.subr.mxu0 0.0
  %1120 = vmatpush1.msra.mxu0 0.0
  %1121 = vmatprep.mubr.f32.mxu0 0.0
  %1122 = vmatmul.mubr.f32.gmra.mrb[0].mxu0 %v1055
  %v1123 = vpop.f32.mrb[0].mxu0
  %v1124 = vadd.f32 %v971, %v1123
  %v1125 = vpop.f32.mrb[0].mxu0
  %1126 = vdwg.mxu0
  %v1128 = vsel %vm972, 0.0, 0
  %1130 = vmatprep.subr.mxu0 0.0
  %1131 = vmatpush1.msra.mxu0 %v31
  %1132 = vmatprep.subr.mxu0 0.0
  %1133 = vmatpush1.msra.mxu0 %v32
  %1134 = vmatprep.subr.mxu0 0.0
  %1135 = vmatpush1.msra.mxu0 %v33
  %1136 = vmatprep.subr.mxu0 0.0
  %1137 = vmatpush1.msra.mxu0 %v34
  %1138 = vmatprep.subr.mxu0 0.0
  %1139 = vmatpush1.msra.mxu0 0.0
  %1140 = vmatprep.subr.mxu0 0.0
  %1141 = vmatpush1.msra.mxu0 0.0
  %1142 = vmatprep.subr.mxu0 0.0
  %1143 = vmatpush1.msra.mxu0 0.0
  %1144 = vmatprep.subr.mxu0 0.0
  %1145 = vmatpush1.msra.mxu0 0.0
  %1146 = vmatprep.subr.mxu0 0.0
  %1147 = vmatpush1.msra.mxu0 0.0
  %1148 = vmatprep.subr.mxu0 0.0
  %1149 = vmatpush1.msra.mxu0 0.0
  %1150 = vmatprep.subr.mxu0 0.0
  %1151 = vmatpush1.msra.mxu0 0.0
  %1152 = vmatprep.subr.mxu0 0.0
  %1153 = vmatpush1.msra.mxu0 0.0
  %1154 = vmatprep.subr.mxu0 0.0
  %1155 = vmatpush1.msra.mxu0 0.0
  %1156 = vmatprep.subr.mxu0 0.0
  %1157 = vmatpush1.msra.mxu0 0.0
  %1158 = vmatprep.subr.mxu0 0.0
  %1159 = vmatpush1.msra.mxu0 0.0
  %1160 = vmatprep.subr.mxu0 0.0
  %1161 = vmatpush1.msra.mxu0 0.0
  %1162 = vmatprep.subr.mxu0 0.0
  %1163 = vmatpush1.msra.mxu0 0.0
  %1164 = vmatprep.subr.mxu0 0.0
  %1165 = vmatpush1.msra.mxu0 0.0
  %1166 = vmatprep.subr.mxu0 0.0
  %1167 = vmatpush1.msra.mxu0 0.0
  %1168 = vmatprep.subr.mxu0 0.0
  %1169 = vmatpush1.msra.mxu0 0.0
  %1170 = vmatprep.subr.mxu0 0.0
  %1171 = vmatpush1.msra.mxu0 0.0
  %1172 = vmatprep.subr.mxu0 0.0
  %1173 = vmatpush1.msra.mxu0 0.0
  %1174 = vmatprep.subr.mxu0 0.0
  %1175 = vmatpush1.msra.mxu0 0.0
  %1176 = vmatprep.subr.mxu0 0.0
  %1177 = vmatpush1.msra.mxu0 0.0
  %1178 = vmatprep.subr.mxu0 0.0
  %1179 = vmatpush1.msra.mxu0 0.0
  %1180 = vmatprep.subr.mxu0 0.0
  %1181 = vmatpush1.msra.mxu0 0.0
  %1182 = vmatprep.subr.mxu0 0.0
  %1183 = vmatpush1.msra.mxu0 0.0
  %1184 = vmatprep.subr.mxu0 0.0
  %1185 = vmatpush1.msra.mxu0 0.0
  %1186 = vmatprep.subr.mxu0 0.0
  %1187 = vmatpush1.msra.mxu0 0.0
  %1188 = vmatprep.subr.mxu0 0.0
  %1189 = vmatpush1.msra.mxu0 0.0
  %1190 = vmatprep.subr.mxu0 0.0
  %1191 = vmatpush1.msra.mxu0 0.0
  %1192 = vmatprep.subr.mxu0 0.0
  %1193 = vmatpush1.msra.mxu0 0.0
  %1194 = vmatprep.mubr.f32.mxu0 0.0
  %1195 = vmatmul.mubr.f32.gmra.mrb[0].mxu0 %v1128
  %v1196 = vpop.f32.mrb[0].mxu0
  %v1197 = vadd.f32 0.0, %v1196
  %v1198 = vpop.f32.mrb[0].mxu0
  %1199 = vdwg.mxu0
  %v1200 = vadd.f32 %v1124, %v1197
  %v1201 = vxor.u32 %v1200, 2147483648
  %v1202 = vmul.f32 %v1201, 1.442695
  %v1203 = vpow.pop %v1202
  %v1204 = vadd.f32 %v1203, 1.0
  %v1205 = vrcp.pop %v1204
  %v1206 = vmul.f32 1.0, %v1205
  %v1207 = vtanh.pop %v1200
  %v1208 = vmul.f32 %v1206, 0.0
  %1210 = vrot.lane.b32.xlu0 %v1207, 64
  %v1211 = vpop.permute.xlu0 %1210
  %v1213 = vmul.f32 %v1206, %v1211
  %1215 = vrot.lane.b32.xlu0 %v1213, 32
  %v1216 = vpop.permute.xlu0 %1215
  %v1218 = vadd.f32 %v1208, %v1216
  %v1219 = vtanh.pop %v1218
  %1221 = vrot.lane.b32.xlu0 %v1219, 64
  %v1222 = vpop.permute.xlu0 %1221
  %v1224 = vmul.f32 %v1206, %v1222
  %1226 = vrot.lane.b32.xlu0 %v1224, 32
  %v1227 = vpop.permute.xlu0 %1226
  %vm1229 = vcmask 254976
  %1230 = vst.msk [vmem:[#allocation2] sm:$0x3] %vm1229, %v1227
  %v1231 = vsel %vm972, %v1227, 0
  %1233 = vmatprep.subr.mxu0 0.0
  %1234 = vmatpush1.msra.mxu0 %v31
  %1235 = vmatprep.subr.mxu0 0.0
  %1236 = vmatpush1.msra.mxu0 %v32
  %1237 = vmatprep.subr.mxu0 0.0
  %1238 = vmatpush1.msra.mxu0 %v33
  %1239 = vmatprep.subr.mxu0 0.0
  %1240 = vmatpush1.msra.mxu0 %v34
  %1241 = vmatprep.subr.mxu0 0.0
  %1242 = vmatpush1.msra.mxu0 0.0
  %1243 = vmatprep.subr.mxu0 0.0
  %1244 = vmatpush1.msra.mxu0 0.0
  %1245 = vmatprep.subr.mxu0 0.0
  %1246 = vmatpush1.msra.mxu0 0.0
  %1247 = vmatprep.subr.mxu0 0.0
  %1248 = vmatpush1.msra.mxu0 0.0
  %1249 = vmatprep.subr.mxu0 0.0
  %1250 = vmatpush1.msra.mxu0 0.0
  %1251 = vmatprep.subr.mxu0 0.0
  %1252 = vmatpush1.msra.mxu0 0.0
  %1253 = vmatprep.subr.mxu0 0.0
  %1254 = vmatpush1.msra.mxu0 0.0
  %1255 = vmatprep.subr.mxu0 0.0
  %1256 = vmatpush1.msra.mxu0 0.0
  %1257 = vmatprep.subr.mxu0 0.0
  %1258 = vmatpush1.msra.mxu0 0.0
  %1259 = vmatprep.subr.mxu0 0.0
  %1260 = vmatpush1.msra.mxu0 0.0
  %1261 = vmatprep.subr.mxu0 0.0
  %1262 = vmatpush1.msra.mxu0 0.0
  %1263 = vmatprep.subr.mxu0 0.0
  %1264 = vmatpush1.msra.mxu0 0.0
  %1265 = vmatprep.subr.mxu0 0.0
  %1266 = vmatpush1.msra.mxu0 0.0
  %1267 = vmatprep.subr.mxu0 0.0
  %1268 = vmatpush1.msra.mxu0 0.0
  %1269 = vmatprep.subr.mxu0 0.0
  %1270 = vmatpush1.msra.mxu0 0.0
  %1271 = vmatprep.subr.mxu0 0.0
  %1272 = vmatpush1.msra.mxu0 0.0
  %1273 = vmatprep.subr.mxu0 0.0
  %1274 = vmatpush1.msra.mxu0 0.0
  %1275 = vmatprep.subr.mxu0 0.0
  %1276 = vmatpush1.msra.mxu0 0.0
  %1277 = vmatprep.subr.mxu0 0.0
  %1278 = vmatpush1.msra.mxu0 0.0
  %1279 = vmatprep.subr.mxu0 0.0
  %1280 = vmatpush1.msra.mxu0 0.0
  %1281 = vmatprep.subr.mxu0 0.0
  %1282 = vmatpush1.msra.mxu0 0.0
  %1283 = vmatprep.subr.mxu0 0.0
  %1284 = vmatpush1.msra.mxu0 0.0
  %1285 = vmatprep.subr.mxu0 0.0
  %1286 = vmatpush1.msra.mxu0 0.0
  %1287 = vmatprep.subr.mxu0 0.0
  %1288 = vmatpush1.msra.mxu0 0.0
  %1289 = vmatprep.subr.mxu0 0.0
  %1290 = vmatpush1.msra.mxu0 0.0
  %1291 = vmatprep.subr.mxu0 0.0
  %1292 = vmatpush1.msra.mxu0 0.0
  %1293 = vmatprep.subr.mxu0 0.0
  %1294 = vmatpush1.msra.mxu0 0.0
  %1295 = vmatprep.subr.mxu0 0.0
  %1296 = vmatpush1.msra.mxu0 0.0
  %1297 = vmatprep.mubr.f32.mxu0 0.0
  %1298 = vmatmul.mubr.f32.gmra.mrb[0].mxu0 %v1231
  %v1299 = vpop.f32.mrb[0].mxu0
  %v1300 = vadd.f32 0.0, %v1299
  %v1301 = vpop.f32.mrb[0].mxu0
  %1302 = vdwg.mxu0
  %v1304 = vrot.slane %v1300, 6
  %v1306 = vadd.f32 %v1046, %v1304
  %v1307 = vxor.u32 %v1306, 2147483648
  %v1308 = vmul.f32 %v1307, 1.442695
  %v1309 = vpow.pop %v1308
  %v1310 = vadd.f32 %v1309, 1.0
  %v1311 = vrcp.pop %v1310
  %v1312 = vmul.f32 1.0, %v1311
  %v1313 = vtanh.pop %v1306
  %v1315 = vrot.slane %v1218, 6
  %v1317 = vmul.f32 %v1312, %v1315
  %1319 = vrot.lane.b32.xlu0 %v1313, 64
  %v1320 = vpop.permute.xlu0 %1319
  %v1322 = vmul.f32 %v1312, %v1320
  %1324 = vrot.lane.b32.xlu0 %v1322, 32
  %v1325 = vpop.permute.xlu0 %1324
  %v1327 = vadd.f32 %v1317, %v1325
  %v1328 = vtanh.pop %v1327
  %1330 = vrot.lane.b32.xlu0 %v1328, 64
  %v1331 = vpop.permute.xlu0 %1330
  %v1333 = vmul.f32 %v1312, %v1331
  %1335 = vrot.lane.b32.xlu0 %v1333, 32
  %v1336 = vpop.permute.xlu0 %1335
  %vm1338 = vcmask 257026
  %1339 = vst.msk [vmem:[#allocation2] sm:$0xc] %vm1338, %v1336
  %v1340 = vrot.slane %v1333, 2
  %1341 = vrot.lane.b32.xlu0 %v1340, 32
  %v1342 = vpop.permute.xlu0 %1341
  %v1343 = vsel %vm972, %v1342, 0
  %1345 = vmatprep.subr.mxu0 0.0
  %1346 = vmatpush1.msra.mxu0 %v31
  %1347 = vmatprep.subr.mxu0 0.0
  %1348 = vmatpush1.msra.mxu0 %v32
  %1349 = vmatprep.subr.mxu0 0.0
  %1350 = vmatpush1.msra.mxu0 %v33
  %1351 = vmatprep.subr.mxu0 0.0
  %1352 = vmatpush1.msra.mxu0 %v34
  %1353 = vmatprep.subr.mxu0 0.0
  %1354 = vmatpush1.msra.mxu0 0.0
  %1355 = vmatprep.subr.mxu0 0.0
  %1356 = vmatpush1.msra.mxu0 0.0
  %1357 = vmatprep.subr.mxu0 0.0
  %1358 = vmatpush1.msra.mxu0 0.0
  %1359 = vmatprep.subr.mxu0 0.0
  %1360 = vmatpush1.msra.mxu0 0.0
  %1361 = vmatprep.subr.mxu0 0.0
  %1362 = vmatpush1.msra.mxu0 0.0
  %1363 = vmatprep.subr.mxu0 0.0
  %1364 = vmatpush1.msra.mxu0 0.0
  %1365 = vmatprep.subr.mxu0 0.0
  %1366 = vmatpush1.msra.mxu0 0.0
  %1367 = vmatprep.subr.mxu0 0.0
  %1368 = vmatpush1.msra.mxu0 0.0
  %1369 = vmatprep.subr.mxu0 0.0
  %1370 = vmatpush1.msra.mxu0 0.0
  %1371 = vmatprep.subr.mxu0 0.0
  %1372 = vmatpush1.msra.mxu0 0.0
  %1373 = vmatprep.subr.mxu0 0.0
  %1374 = vmatpush1.msra.mxu0 0.0
  %1375 = vmatprep.subr.mxu0 0.0
  %1376 = vmatpush1.msra.mxu0 0.0
  %1377 = vmatprep.subr.mxu0 0.0
  %1378 = vmatpush1.msra.mxu0 0.0
  %1379 = vmatprep.subr.mxu0 0.0
  %1380 = vmatpush1.msra.mxu0 0.0
  %1381 = vmatprep.subr.mxu0 0.0
  %1382 = vmatpush1.msra.mxu0 0.0
  %1383 = vmatprep.subr.mxu0 0.0
  %1384 = vmatpush1.msra.mxu0 0.0
  %1385 = vmatprep.subr.mxu0 0.0
  %1386 = vmatpush1.msra.mxu0 0.0
  %1387 = vmatprep.subr.mxu0 0.0
  %1388 = vmatpush1.msra.mxu0 0.0
  %1389 = vmatprep.subr.mxu0 0.0
  %1390 = vmatpush1.msra.mxu0 0.0
  %1391 = vmatprep.subr.mxu0 0.0
  %1392 = vmatpush1.msra.mxu0 0.0
  %1393 = vmatprep.subr.mxu0 0.0
  %1394 = vmatpush1.msra.mxu0 0.0
  %1395 = vmatprep.subr.mxu0 0.0
  %1396 = vmatpush1.msra.mxu0 0.0
  %1397 = vmatprep.subr.mxu0 0.0
  %1398 = vmatpush1.msra.mxu0 0.0
  %1399 = vmatprep.subr.mxu0 0.0
  %1400 = vmatpush1.msra.mxu0 0.0
  %1401 = vmatprep.subr.mxu0 0.0
  %1402 = vmatpush1.msra.mxu0 0.0
  %1403 = vmatprep.subr.mxu0 0.0
  %1404 = vmatpush1.msra.mxu0 0.0
  %1405 = vmatprep.subr.mxu0 0.0
  %1406 = vmatpush1.msra.mxu0 0.0
  %1407 = vmatprep.subr.mxu0 0.0
  %1408 = vmatpush1.msra.mxu0 0.0
  %1409 = vmatprep.mubr.f32.mxu0 0.0
  %1410 = vmatmul.mubr.f32.gmra.mrb[0].mxu0 %v1343
  %v1411 = vpop.f32.mrb[0].mxu0
  %v1412 = vadd.f32 0.0, %v1411
  %v1413 = vpop.f32.mrb[0].mxu0
  %1414 = vdwg.mxu0
  %v1416 = vrot.slane %v1412, 4
  %v1418 = vadd.f32 %v1046, %v1416
  %v1419 = vxor.u32 %v1418, 2147483648
  %v1420 = vmul.f32 %v1419, 1.442695
  %v1421 = vpow.pop %v1420
  %v1422 = vadd.f32 %v1421, 1.0
  %v1423 = vrcp.pop %v1422
  %v1424 = vmul.f32 1.0, %v1423
  %v1425 = vtanh.pop %v1418
  %v1427 = vrot.slane %v1327, 6
  %v1429 = vmul.f32 %v1424, %v1427
  %1431 = vrot.lane.b32.xlu0 %v1425, 64
  %v1432 = vpop.permute.xlu0 %1431
  %v1434 = vmul.f32 %v1424, %v1432
  %1436 = vrot.lane.b32.xlu0 %v1434, 32
  %v1437 = vpop.permute.xlu0 %1436
  %v1439 = vadd.f32 %v1429, %v1437
  %v1440 = vtanh.pop %v1439
  %1442 = vrot.lane.b32.xlu0 %v1440, 64
  %v1443 = vpop.permute.xlu0 %1442
  %v1445 = vmul.f32 %v1424, %v1443
  %1447 = vrot.lane.b32.xlu0 %v1445, 32
  %v1448 = vpop.permute.xlu0 %1447
  %vm1450 = vcmask 259076
  %1451 = vst.msk [vmem:[#allocation2] sm:$0x30] %vm1450, %v1448
  %v1452 = vrot.slane %v1445, 4
  %1453 = vrot.lane.b32.xlu0 %v1452, 32
  %v1454 = vpop.permute.xlu0 %1453
  %v1455 = vsel %vm972, %v1454, 0
  %1457 = vmatprep.subr.mxu0 0.0
  %1458 = vmatpush1.msra.mxu0 %v31
  %1459 = vmatprep.subr.mxu0 0.0
  %1460 = vmatpush1.msra.mxu0 %v32
  %1461 = vmatprep.subr.mxu0 0.0
  %1462 = vmatpush1.msra.mxu0 %v33
  %1463 = vmatprep.subr.mxu0 0.0
  %1464 = vmatpush1.msra.mxu0 %v34
  %1465 = vmatprep.subr.mxu0 0.0
  %1466 = vmatpush1.msra.mxu0 0.0
  %1467 = vmatprep.subr.mxu0 0.0
  %1468 = vmatpush1.msra.mxu0 0.0
  %1469 = vmatprep.subr.mxu0 0.0
  %1470 = vmatpush1.msra.mxu0 0.0
  %1471 = vmatprep.subr.mxu0 0.0
  %1472 = vmatpush1.msra.mxu0 0.0
  %1473 = vmatprep.subr.mxu0 0.0
  %1474 = vmatpush1.msra.mxu0 0.0
  %1475 = vmatprep.subr.mxu0 0.0
  %1476 = vmatpush1.msra.mxu0 0.0
  %1477 = vmatprep.subr.mxu0 0.0
  %1478 = vmatpush1.msra.mxu0 0.0
  %1479 = vmatprep.subr.mxu0 0.0
  %1480 = vmatpush1.msra.mxu0 0.0
  %1481 = vmatprep.subr.mxu0 0.0
  %1482 = vmatpush1.msra.mxu0 0.0
  %1483 = vmatprep.subr.mxu0 0.0
  %1484 = vmatpush1.msra.mxu0 0.0
  %1485 = vmatprep.subr.mxu0 0.0
  %1486 = vmatpush1.msra.mxu0 0.0
  %1487 = vmatprep.subr.mxu0 0.0
  %1488 = vmatpush1.msra.mxu0 0.0
  %1489 = vmatprep.subr.mxu0 0.0
  %1490 = vmatpush1.msra.mxu0 0.0
  %1491 = vmatprep.subr.mxu0 0.0
  %1492 = vmatpush1.msra.mxu0 0.0
  %1493 = vmatprep.subr.mxu0 0.0
  %1494 = vmatpush1.msra.mxu0 0.0
  %1495 = vmatprep.subr.mxu0 0.0
  %1496 = vmatpush1.msra.mxu0 0.0
  %1497 = vmatprep.subr.mxu0 0.0
  %1498 = vmatpush1.msra.mxu0 0.0
  %1499 = vmatprep.subr.mxu0 0.0
  %1500 = vmatpush1.msra.mxu0 0.0
  %1501 = vmatprep.subr.mxu0 0.0
  %1502 = vmatpush1.msra.mxu0 0.0
  %1503 = vmatprep.subr.mxu0 0.0
  %1504 = vmatpush1.msra.mxu0 0.0
  %1505 = vmatprep.subr.mxu0 0.0
  %1506 = vmatpush1.msra.mxu0 0.0
  %1507 = vmatprep.subr.mxu0 0.0
  %1508 = vmatpush1.msra.mxu0 0.0
  %1509 = vmatprep.subr.mxu0 0.0
  %1510 = vmatpush1.msra.mxu0 0.0
  %1511 = vmatprep.subr.mxu0 0.0
  %1512 = vmatpush1.msra.mxu0 0.0
  %1513 = vmatprep.subr.mxu0 0.0
  %1514 = vmatpush1.msra.mxu0 0.0
  %1515 = vmatprep.subr.mxu0 0.0
  %1516 = vmatpush1.msra.mxu0 0.0
  %1517 = vmatprep.subr.mxu0 0.0
  %1518 = vmatpush1.msra.mxu0 0.0
  %1519 = vmatprep.subr.mxu0 0.0
  %1520 = vmatpush1.msra.mxu0 0.0
  %1521 = vmatprep.mubr.f32.mxu0 0.0
  %1522 = vmatmul.mubr.f32.gmra.mrb[0].mxu0 %v1455
  %v1523 = vpop.f32.mrb[0].mxu0
  %v1524 = vadd.f32 0.0, %v1523
  %v1525 = vpop.f32.mrb[0].mxu0
  %1526 = vdwg.mxu0
  %v1528 = vrot.slane %v1524, 2
  %v1530 = vadd.f32 %v1046, %v1528
  %v1531 = vxor.u32 %v1530, 2147483648
  %v1532 = vmul.f32 %v1531, 1.442695
  %v1533 = vpow.pop %v1532
  %v1534 = vadd.f32 %v1533, 1.0
  %v1535 = vrcp.pop %v1534
  %v1536 = vmul.f32 1.0, %v1535
  %v1537 = vtanh.pop %v1530
  %v1539 = vrot.slane %v1439, 6
  %v1541 = vmul.f32 %v1536, %v1539
  %1543 = vrot.lane.b32.xlu0 %v1537, 64
  %v1544 = vpop.permute.xlu0 %1543
  %v1546 = vmul.f32 %v1536, %v1544
  %1548 = vrot.lane.b32.xlu0 %v1546, 32
  %v1549 = vpop.permute.xlu0 %1548
  %v1551 = vadd.f32 %v1541, %v1549
  %v1552 = vtanh.pop %v1551
  %1554 = vrot.lane.b32.xlu0 %v1552, 64
  %v1555 = vpop.permute.xlu0 %1554
  %v1557 = vmul.f32 %v1536, %v1555
  %1559 = vrot.lane.b32.xlu0 %v1557, 32
  %v1560 = vpop.permute.xlu0 %1559
  %vm1562 = vcmask 261126
  %1563 = vst.msk [vmem:[#allocation2] sm:$0xc0] %vm1562, %v1560
  %v1564 = vrot.slane %v1557, 6
  %1565 = vrot.lane.b32.xlu0 %v1564, 32
  %v1566 = vpop.permute.xlu0 %1565
  %v1567 = vsel %vm972, %v1566, 0
  %1569 = vmatprep.subr.mxu0 0.0
  %1570 = vmatpush1.msra.mxu0 %v31
  %1571 = vmatprep.subr.mxu0 0.0
  %1572 = vmatpush1.msra.mxu0 %v32
  %1573 = vmatprep.subr.mxu0 0.0
  %1574 = vmatpush1.msra.mxu0 %v33
  %1575 = vmatprep.subr.mxu0 0.0
  %1576 = vmatpush1.msra.mxu0 %v34
  %1577 = vmatprep.subr.mxu0 0.0
  %1578 = vmatpush1.msra.mxu0 0.0
  %1579 = vmatprep.subr.mxu0 0.0
  %1580 = vmatpush1.msra.mxu0 0.0
  %1581 = vmatprep.subr.mxu0 0.0
  %1582 = vmatpush1.msra.mxu0 0.0
  %1583 = vmatprep.subr.mxu0 0.0
  %1584 = vmatpush1.msra.mxu0 0.0
  %1585 = vmatprep.subr.mxu0 0.0
  %1586 = vmatpush1.msra.mxu0 0.0
  %1587 = vmatprep.subr.mxu0 0.0
  %1588 = vmatpush1.msra.mxu0 0.0
  %1589 = vmatprep.subr.mxu0 0.0
  %1590 = vmatpush1.msra.mxu0 0.0
  %1591 = vmatprep.subr.mxu0 0.0
  %1592 = vmatpush1.msra.mxu0 0.0
  %1593 = vmatprep.subr.mxu0 0.0
  %1594 = vmatpush1.msra.mxu0 0.0
  %1595 = vmatprep.subr.mxu0 0.0
  %1596 = vmatpush1.msra.mxu0 0.0
  %1597 = vmatprep.subr.mxu0 0.0
  %1598 = vmatpush1.msra.mxu0 0.0
  %1599 = vmatprep.subr.mxu0 0.0
  %1600 = vmatpush1.msra.mxu0 0.0
  %1601 = vmatprep.subr.mxu0 0.0
  %1602 = vmatpush1.msra.mxu0 0.0
  %1603 = vmatprep.subr.mxu0 0.0
  %1604 = vmatpush1.msra.mxu0 0.0
  %1605 = vmatprep.subr.mxu0 0.0
  %1606 = vmatpush1.msra.mxu0 0.0
  %1607 = vmatprep.subr.mxu0 0.0
  %1608 = vmatpush1.msra.mxu0 0.0
  %1609 = vmatprep.subr.mxu0 0.0
  %1610 = vmatpush1.msra.mxu0 0.0
  %1611 = vmatprep.subr.mxu0 0.0
  %1612 = vmatpush1.msra.mxu0 0.0
  %1613 = vmatprep.subr.mxu0 0.0
  %1614 = vmatpush1.msra.mxu0 0.0
  %1615 = vmatprep.subr.mxu0 0.0
  %1616 = vmatpush1.msra.mxu0 0.0
  %1617 = vmatprep.subr.mxu0 0.0
  %1618 = vmatpush1.msra.mxu0 0.0
  %1619 = vmatprep.subr.mxu0 0.0
  %1620 = vmatpush1.msra.mxu0 0.0
  %1621 = vmatprep.subr.mxu0 0.0
  %1622 = vmatpush1.msra.mxu0 0.0
  %1623 = vmatprep.subr.mxu0 0.0
  %1624 = vmatpush1.msra.mxu0 0.0
  %1625 = vmatprep.subr.mxu0 0.0
  %1626 = vmatpush1.msra.mxu0 0.0
  %1627 = vmatprep.subr.mxu0 0.0
  %1628 = vmatpush1.msra.mxu0 0.0
  %1629 = vmatprep.subr.mxu0 0.0
  %1630 = vmatpush1.msra.mxu0 0.0
  %1631 = vmatprep.subr.mxu0 0.0
  %1632 = vmatpush1.msra.mxu0 0.0
  %1633 = vmatprep.mubr.f32.mxu0 0.0
  %1634 = vmatmul.mubr.f32.gmra.mrb[0].mxu0 %v1567
  %v1635 = vpop.f32.mrb[0].mxu0
  %v1636 = vadd.f32 0.0, %v1635
  %v1637 = vpop.f32.mrb[0].mxu0
  %1638 = vdwg.mxu0
  %v1639 = vadd.f32 %v1051, %v1636
  %v1640 = vxor.u32 %v1639, 2147483648
  %v1641 = vmul.f32 %v1640, 1.442695
  %v1642 = vpow.pop %v1641
  %v1643 = vadd.f32 %v1642, 1.0
  %v1644 = vrcp.pop %v1643
  %v1645 = vmul.f32 1.0, %v1644
  %v1646 = vtanh.pop %v1639
  %v1648 = vrot.slane %v1551, 6
  %v1650 = vmul.f32 %v1645, %v1648
  %1652 = vrot.lane.b32.xlu0 %v1646, 64
  %v1653 = vpop.permute.xlu0 %1652
  %v1655 = vmul.f32 %v1645, %v1653
  %1657 = vrot.lane.b32.xlu0 %v1655, 32
  %v1658 = vpop.permute.xlu0 %1657
  %v1660 = vadd.f32 %v1650, %v1658
  %v1661 = vtanh.pop %v1660
  %1663 = vrot.lane.b32.xlu0 %v1661, 64
  %v1664 = vpop.permute.xlu0 %1663
  %v1666 = vmul.f32 %v1645, %v1664
  %1668 = vrot.lane.b32.xlu0 %v1666, 32
  %v1669 = vpop.permute.xlu0 %1668
  %1671 = vst.msk [vmem:[#allocation2 + $0x8] sm:$0x3] %vm1229, %v1669
  %v1672 = vsel %vm972, %v1669, 0
  %1674 = vmatprep.subr.mxu0 0.0
  %1675 = vmatpush1.msra.mxu0 %v31
  %1676 = vmatprep.subr.mxu0 0.0
  %1677 = vmatpush1.msra.mxu0 %v32
  %1678 = vmatprep.subr.mxu0 0.0
  %1679 = vmatpush1.msra.mxu0 %v33
  %1680 = vmatprep.subr.mxu0 0.0
  %1681 = vmatpush1.msra.mxu0 %v34
  %1682 = vmatprep.subr.mxu0 0.0
  %1683 = vmatpush1.msra.mxu0 0.0
  %1684 = vmatprep.subr.mxu0 0.0
  %1685 = vmatpush1.msra.mxu0 0.0
  %1686 = vmatprep.subr.mxu0 0.0
  %1687 = vmatpush1.msra.mxu0 0.0
  %1688 = vmatprep.subr.mxu0 0.0
  %1689 = vmatpush1.msra.mxu0 0.0
  %1690 = vmatprep.subr.mxu0 0.0
  %1691 = vmatpush1.msra.mxu0 0.0
  %1692 = vmatprep.subr.mxu0 0.0
  %1693 = vmatpush1.msra.mxu0 0.0
  %1694 = vmatprep.subr.mxu0 0.0
  %1695 = vmatpush1.msra.mxu0 0.0
  %1696 = vmatprep.subr.mxu0 0.0
  %1697 = vmatpush1.msra.mxu0 0.0
  %1698 = vmatprep.subr.mxu0 0.0
  %1699 = vmatpush1.msra.mxu0 0.0
  %1700 = vmatprep.subr.mxu0 0.0
  %1701 = vmatpush1.msra.mxu0 0.0
  %1702 = vmatprep.subr.mxu0 0.0
  %1703 = vmatpush1.msra.mxu0 0.0
  %1704 = vmatprep.subr.mxu0 0.0
  %1705 = vmatpush1.msra.mxu0 0.0
  %1706 = vmatprep.subr.mxu0 0.0
  %1707 = vmatpush1.msra.mxu0 0.0
  %1708 = vmatprep.subr.mxu0 0.0
  %1709 = vmatpush1.msra.mxu0 0.0
  %1710 = vmatprep.subr.mxu0 0.0
  %1711 = vmatpush1.msra.mxu0 0.0
  %1712 = vmatprep.subr.mxu0 0.0
  %1713 = vmatpush1.msra.mxu0 0.0
  %1714 = vmatprep.subr.mxu0 0.0
  %1715 = vmatpush1.msra.mxu0 0.0
  %1716 = vmatprep.subr.mxu0 0.0
  %1717 = vmatpush1.msra.mxu0 0.0
  %1718 = vmatprep.subr.mxu0 0.0
  %1719 = vmatpush1.msra.mxu0 0.0
  %1720 = vmatprep.subr.mxu0 0.0
  %1721 = vmatpush1.msra.mxu0 0.0
  %1722 = vmatprep.subr.mxu0 0.0
  %1723 = vmatpush1.msra.mxu0 0.0
  %1724 = vmatprep.subr.mxu0 0.0
  %1725 = vmatpush1.msra.mxu0 0.0
  %1726 = vmatprep.subr.mxu0 0.0
  %1727 = vmatpush1.msra.mxu0 0.0
  %1728 = vmatprep.subr.mxu0 0.0
  %1729 = vmatpush1.msra.mxu0 0.0
  %1730 = vmatprep.subr.mxu0 0.0
  %1731 = vmatpush1.msra.mxu0 0.0
  %1732 = vmatprep.subr.mxu0 0.0
  %1733 = vmatpush1.msra.mxu0 0.0
  %1734 = vmatprep.subr.mxu0 0.0
  %1735 = vmatpush1.msra.mxu0 0.0
  %1736 = vmatprep.subr.mxu0 0.0
  %1737 = vmatpush1.msra.mxu0 0.0
  %1738 = vmatprep.mubr.f32.mxu0 0.0
  %1739 = vmatmul.mubr.f32.gmra.mrb[0].mxu0 %v1672
  %v1740 = vpop.f32.mrb[0].mxu0
  %v1741 = vadd.f32 0.0, %v1740
  %v1742 = vpop.f32.mrb[0].mxu0
  %1743 = vdwg.mxu0
  %v1745 = vrot.slane %v1741, 6
  %v1747 = vadd.f32 %v1051, %v1745
  %v1748 = vxor.u32 %v1747, 2147483648
  %v1749 = vmul.f32 %v1748, 1.442695
  %v1750 = vpow.pop %v1749
  %v1751 = vadd.f32 %v1750, 1.0
  %v1752 = vrcp.pop %v1751
  %v1753 = vmul.f32 1.0, %v1752
  %v1754 = vtanh.pop %v1747
  %v1756 = vrot.slane %v1660, 6
  %v1758 = vmul.f32 %v1753, %v1756
  %1760 = vrot.lane.b32.xlu0 %v1754, 64
  %v1761 = vpop.permute.xlu0 %1760
  %v1763 = vmul.f32 %v1753, %v1761
  %1765 = vrot.lane.b32.xlu0 %v1763, 32
  %v1766 = vpop.permute.xlu0 %1765
  %v1768 = vadd.f32 %v1758, %v1766
  %v1769 = vtanh.pop %v1768
  %1771 = vrot.lane.b32.xlu0 %v1769, 64
  %v1772 = vpop.permute.xlu0 %1771
  %v1774 = vmul.f32 %v1753, %v1772
  %1776 = vrot.lane.b32.xlu0 %v1774, 32
  %v1777 = vpop.permute.xlu0 %1776
  %1779 = vst.msk [vmem:[#allocation2 + $0x8] sm:$0xc] %vm1338, %v1777
  %v1780 = vrot.slane %v1774, 2
  %1781 = vrot.lane.b32.xlu0 %v1780, 32
  %v1782 = vpop.permute.xlu0 %1781
  %v1783 = vsel %vm972, %v1782, 0
  %1785 = vmatprep.subr.mxu0 0.0
  %1786 = vmatpush1.msra.mxu0 %v31
  %1787 = vmatprep.subr.mxu0 0.0
  %1788 = vmatpush1.msra.mxu0 %v32
  %1789 = vmatprep.subr.mxu0 0.0
  %1790 = vmatpush1.msra.mxu0 %v33
  %1791 = vmatprep.subr.mxu0 0.0
  %1792 = vmatpush1.msra.mxu0 %v34
  %1793 = vmatprep.subr.mxu0 0.0
  %1794 = vmatpush1.msra.mxu0 0.0
  %1795 = vmatprep.subr.mxu0 0.0
  %1796 = vmatpush1.msra.mxu0 0.0
  %1797 = vmatprep.subr.mxu0 0.0
  %1798 = vmatpush1.msra.mxu0 0.0
  %1799 = vmatprep.subr.mxu0 0.0
  %1800 = vmatpush1.msra.mxu0 0.0
  %1801 = vmatprep.subr.mxu0 0.0
  %1802 = vmatpush1.msra.mxu0 0.0
  %1803 = vmatprep.subr.mxu0 0.0
  %1804 = vmatpush1.msra.mxu0 0.0
  %1805 = vmatprep.subr.mxu0 0.0
  %1806 = vmatpush1.msra.mxu0 0.0
  %1807 = vmatprep.subr.mxu0 0.0
  %1808 = vmatpush1.msra.mxu0 0.0
  %1809 = vmatprep.subr.mxu0 0.0
  %1810 = vmatpush1.msra.mxu0 0.0
  %1811 = vmatprep.subr.mxu0 0.0
  %1812 = vmatpush1.msra.mxu0 0.0
  %1813 = vmatprep.subr.mxu0 0.0
  %1814 = vmatpush1.msra.mxu0 0.0
  %1815 = vmatprep.subr.mxu0 0.0
  %1816 = vmatpush1.msra.mxu0 0.0
  %1817 = vmatprep.subr.mxu0 0.0
  %1818 = vmatpush1.msra.mxu0 0.0
  %1819 = vmatprep.subr.mxu0 0.0
  %1820 = vmatpush1.msra.mxu0 0.0
  %1821 = vmatprep.subr.mxu0 0.0
  %1822 = vmatpush1.msra.mxu0 0.0
  %1823 = vmatprep.subr.mxu0 0.0
  %1824 = vmatpush1.msra.mxu0 0.0
  %1825 = vmatprep.subr.mxu0 0.0
  %1826 = vmatpush1.msra.mxu0 0.0
  %1827 = vmatprep.subr.mxu0 0.0
  %1828 = vmatpush1.msra.mxu0 0.0
  %1829 = vmatprep.subr.mxu0 0.0
  %1830 = vmatpush1.msra.mxu0 0.0
  %1831 = vmatprep.subr.mxu0 0.0
  %1832 = vmatpush1.msra.mxu0 0.0
  %1833 = vmatprep.subr.mxu0 0.0
  %1834 = vmatpush1.msra.mxu0 0.0
  %1835 = vmatprep.subr.mxu0 0.0
  %1836 = vmatpush1.msra.mxu0 0.0
  %1837 = vmatprep.subr.mxu0 0.0
  %1838 = vmatpush1.msra.mxu0 0.0
  %1839 = vmatprep.subr.mxu0 0.0
  %1840 = vmatpush1.msra.mxu0 0.0
  %1841 = vmatprep.subr.mxu0 0.0
  %1842 = vmatpush1.msra.mxu0 0.0
  %1843 = vmatprep.subr.mxu0 0.0
  %1844 = vmatpush1.msra.mxu0 0.0
  %1845 = vmatprep.subr.mxu0 0.0
  %1846 = vmatpush1.msra.mxu0 0.0
  %1847 = vmatprep.subr.mxu0 0.0
  %1848 = vmatpush1.msra.mxu0 0.0
  %1849 = vmatprep.mubr.f32.mxu0 0.0
  %1850 = vmatmul.mubr.f32.gmra.mrb[0].mxu0 %v1783
  %v1851 = vpop.f32.mrb[0].mxu0
  %v1852 = vadd.f32 0.0, %v1851
  %v1853 = vpop.f32.mrb[0].mxu0
  %1854 = vdwg.mxu0
  %v1856 = vrot.slane %v1852, 4
  %v1858 = vadd.f32 %v1051, %v1856
  %v1859 = vxor.u32 %v1858, 2147483648
  %v1860 = vmul.f32 %v1859, 1.442695
  %v1861 = vpow.pop %v1860
  %v1862 = vadd.f32 %v1861, 1.0
  %v1863 = vrcp.pop %v1862
  %v1864 = vmul.f32 1.0, %v1863
  %v1865 = vtanh.pop %v1858
  %v1867 = vrot.slane %v1768, 6
  %v1869 = vmul.f32 %v1864, %v1867
  %1871 = vrot.lane.b32.xlu0 %v1865, 64
  %v1872 = vpop.permute.xlu0 %1871
  %v1874 = vmul.f32 %v1864, %v1872
  %1876 = vrot.lane.b32.xlu0 %v1874, 32
  %v1877 = vpop.permute.xlu0 %1876
  %v1879 = vadd.f32 %v1869, %v1877
  %v1880 = vtanh.pop %v1879
  %1882 = vrot.lane.b32.xlu0 %v1880, 64
  %v1883 = vpop.permute.xlu0 %1882
  %v1885 = vmul.f32 %v1864, %v1883
  %1887 = vrot.lane.b32.xlu0 %v1885, 32
  %v1888 = vpop.permute.xlu0 %1887
  %1890 = vst.msk [vmem:[#allocation2 + $0x8] sm:$0x30] %vm1450, %v1888
  %v1891 = vrot.slane %v1885, 4
  %1892 = vrot.lane.b32.xlu0 %v1891, 32
  %v1893 = vpop.permute.xlu0 %1892
  %v1894 = vsel %vm972, %v1893, 0
  %1896 = vmatprep.subr.mxu0 0.0
  %1897 = vmatpush1.msra.mxu0 %v31
  %1898 = vmatprep.subr.mxu0 0.0
  %1899 = vmatpush1.msra.mxu0 %v32
  %1900 = vmatprep.subr.mxu0 0.0
  %1901 = vmatpush1.msra.mxu0 %v33
  %1902 = vmatprep.subr.mxu0 0.0
  %1903 = vmatpush1.msra.mxu0 %v34
  %1904 = vmatprep.subr.mxu0 0.0
  %1905 = vmatpush1.msra.mxu0 0.0
  %1906 = vmatprep.subr.mxu0 0.0
  %1907 = vmatpush1.msra.mxu0 0.0
  %1908 = vmatprep.subr.mxu0 0.0
  %1909 = vmatpush1.msra.mxu0 0.0
  %1910 = vmatprep.subr.mxu0 0.0
  %1911 = vmatpush1.msra.mxu0 0.0
  %1912 = vmatprep.subr.mxu0 0.0
  %1913 = vmatpush1.msra.mxu0 0.0
  %1914 = vmatprep.subr.mxu0 0.0
  %1915 = vmatpush1.msra.mxu0 0.0
  %1916 = vmatprep.subr.mxu0 0.0
  %1917 = vmatpush1.msra.mxu0 0.0
  %1918 = vmatprep.subr.mxu0 0.0
  %1919 = vmatpush1.msra.mxu0 0.0
  %1920 = vmatprep.subr.mxu0 0.0
  %1921 = vmatpush1.msra.mxu0 0.0
  %1922 = vmatprep.subr.mxu0 0.0
  %1923 = vmatpush1.msra.mxu0 0.0
  %1924 = vmatprep.subr.mxu0 0.0
  %1925 = vmatpush1.msra.mxu0 0.0
  %1926 = vmatprep.subr.mxu0 0.0
  %1927 = vmatpush1.msra.mxu0 0.0
  %1928 = vmatprep.subr.mxu0 0.0
  %1929 = vmatpush1.msra.mxu0 0.0
  %1930 = vmatprep.subr.mxu0 0.0
  %1931 = vmatpush1.msra.mxu0 0.0
  %1932 = vmatprep.subr.mxu0 0.0
  %1933 = vmatpush1.msra.mxu0 0.0
  %1934 = vmatprep.subr.mxu0 0.0
  %1935 = vmatpush1.msra.mxu0 0.0
  %1936 = vmatprep.subr.mxu0 0.0
  %1937 = vmatpush1.msra.mxu0 0.0
  %1938 = vmatprep.subr.mxu0 0.0
  %1939 = vmatpush1.msra.mxu0 0.0
  %1940 = vmatprep.subr.mxu0 0.0
  %1941 = vmatpush1.msra.mxu0 0.0
  %1942 = vmatprep.subr.mxu0 0.0
  %1943 = vmatpush1.msra.mxu0 0.0
  %1944 = vmatprep.subr.mxu0 0.0
  %1945 = vmatpush1.msra.mxu0 0.0
  %1946 = vmatprep.subr.mxu0 0.0
  %1947 = vmatpush1.msra.mxu0 0.0
  %1948 = vmatprep.subr.mxu0 0.0
  %1949 = vmatpush1.msra.mxu0 0.0
  %1950 = vmatprep.subr.mxu0 0.0
  %1951 = vmatpush1.msra.mxu0 0.0
  %1952 = vmatprep.subr.mxu0 0.0
  %1953 = vmatpush1.msra.mxu0 0.0
  %1954 = vmatprep.subr.mxu0 0.0
  %1955 = vmatpush1.msra.mxu0 0.0
  %1956 = vmatprep.subr.mxu0 0.0
  %1957 = vmatpush1.msra.mxu0 0.0
  %1958 = vmatprep.subr.mxu0 0.0
  %1959 = vmatpush1.msra.mxu0 0.0
  %1960 = vmatprep.mubr.f32.mxu0 0.0
  %1961 = vmatmul.mubr.f32.gmra.mrb[0].mxu0 %v1894
  %v1962 = vpop.f32.mrb[0].mxu0
  %v1963 = vadd.f32 0.0, %v1962
  %v1964 = vpop.f32.mrb[0].mxu0
  %1965 = vdwg.mxu0
  %v1967 = vrot.slane %v1963, 2
  %v1969 = vadd.f32 %v1051, %v1967
  %v1970 = vxor.u32 %v1969, 2147483648
  %v1971 = vmul.f32 %v1970, 1.442695
  %v1972 = vpow.pop %v1971
  %v1973 = vadd.f32 %v1972, 1.0
  %v1974 = vrcp.pop %v1973
  %v1975 = vmul.f32 1.0, %v1974
  %v1976 = vtanh.pop %v1969
  %v1978 = vrot.slane %v1879, 6
  %v1980 = vmul.f32 %v1975, %v1978
  %1982 = vrot.lane.b32.xlu0 %v1976, 64
  %v1983 = vpop.permute.xlu0 %1982
  %v1985 = vmul.f32 %v1975, %v1983
  %1987 = vrot.lane.b32.xlu0 %v1985, 32
  %v1988 = vpop.permute.xlu0 %1987
  %v1990 = vadd.f32 %v1980, %v1988
  %v1991 = vtanh.pop %v1990
  %1993 = vrot.lane.b32.xlu0 %v1991, 64
  %v1994 = vpop.permute.xlu0 %1993
  %v1996 = vmul.f32 %v1975, %v1994
  %1998 = vrot.lane.b32.xlu0 %v1996, 32
  %v1999 = vpop.permute.xlu0 %1998
  %2001 = vst.msk [vmem:[#allocation2 + $0x8] sm:$0xc0] %vm1562, %v1999
  %v2002 = vld [vmem:[#allocation2] sm:$0xff]
  %v2003 = vld [vmem:[#allocation2 + $0x8] sm:$0xff]
  %v2004 = vlaneseq
  %v2005 = vshrl.u32 %v2004, 7
  %v2006 = vsub.s32 0, %v2005
  %v2007 = vrot.slane %v40, %v2006
  %v2009 = vsel %vm972, %v2002, 0
  %v2012 = vsel %vm972, %v2003, 0
  %2014 = vmatprep.subr.mxu0 0.0
  %2015 = vmatpush1.msra.mxu0 %v35
  %2016 = vmatprep.subr.mxu0 0.0
  %2017 = vmatpush1.msra.mxu0 %v36
  %2018 = vmatprep.subr.mxu0 0.0
  %2019 = vmatpush1.msra.mxu0 %v37
  %2020 = vmatprep.subr.mxu0 0.0
  %2021 = vmatpush1.msra.mxu0 %v38
  %2022 = vmatprep.subr.mxu0 0.0
  %2023 = vmatpush1.msra.mxu0 0.0
  %2024 = vmatprep.subr.mxu0 0.0
  %2025 = vmatpush1.msra.mxu0 0.0
  %2026 = vmatprep.subr.mxu0 0.0
  %2027 = vmatpush1.msra.mxu0 0.0
  %2028 = vmatprep.subr.mxu0 0.0
  %2029 = vmatpush1.msra.mxu0 0.0
  %2030 = vmatprep.subr.mxu0 0.0
  %2031 = vmatpush1.msra.mxu0 0.0
  %2032 = vmatprep.subr.mxu0 0.0
  %2033 = vmatpush1.msra.mxu0 0.0
  %2034 = vmatprep.subr.mxu0 0.0
  %2035 = vmatpush1.msra.mxu0 0.0
  %2036 = vmatprep.subr.mxu0 0.0
  %2037 = vmatpush1.msra.mxu0 0.0
  %2038 = vmatprep.subr.mxu0 0.0
  %2039 = vmatpush1.msra.mxu0 0.0
  %2040 = vmatprep.subr.mxu0 0.0
  %2041 = vmatpush1.msra.mxu0 0.0
  %2042 = vmatprep.subr.mxu0 0.0
  %2043 = vmatpush1.msra.mxu0 0.0
  %2044 = vmatprep.subr.mxu0 0.0
  %2045 = vmatpush1.msra.mxu0 0.0
  %2046 = vmatprep.subr.mxu0 0.0
  %2047 = vmatpush1.msra.mxu0 0.0
  %2048 = vmatprep.subr.mxu0 0.0
  %2049 = vmatpush1.msra.mxu0 0.0
  %2050 = vmatprep.subr.mxu0 0.0
  %2051 = vmatpush1.msra.mxu0 0.0
  %2052 = vmatprep.subr.mxu0 0.0
  %2053 = vmatpush1.msra.mxu0 0.0
  %2054 = vmatprep.subr.mxu0 0.0
  %2055 = vmatpush1.msra.mxu0 0.0
  %2056 = vmatprep.subr.mxu0 0.0
  %2057 = vmatpush1.msra.mxu0 0.0
  %2058 = vmatprep.subr.mxu0 0.0
  %2059 = vmatpush1.msra.mxu0 0.0
  %2060 = vmatprep.subr.mxu0 0.0
  %2061 = vmatpush1.msra.mxu0 0.0
  %2062 = vmatprep.subr.mxu0 0.0
  %2063 = vmatpush1.msra.mxu0 0.0
  %2064 = vmatprep.subr.mxu0 0.0
  %2065 = vmatpush1.msra.mxu0 0.0
  %2066 = vmatprep.subr.mxu0 0.0
  %2067 = vmatpush1.msra.mxu0 0.0
  %2068 = vmatprep.subr.mxu0 0.0
  %2069 = vmatpush1.msra.mxu0 0.0
  %2070 = vmatprep.subr.mxu0 0.0
  %2071 = vmatpush1.msra.mxu0 0.0
  %2072 = vmatprep.subr.mxu0 0.0
  %2073 = vmatpush1.msra.mxu0 0.0
  %2074 = vmatprep.subr.mxu0 0.0
  %2075 = vmatpush1.msra.mxu0 0.0
  %2076 = vmatprep.subr.mxu0 0.0
  %2077 = vmatpush1.msra.mxu0 0.0
  %2078 = vmatprep.mubr.f32.mxu0 0.0
  %2079 = vmatmul.mubr.f32.gmra.mrb[0].mxu0 %v2009
  %v2080 = vpop.f32.mrb[0].mxu0
  %v2081 = vadd.f32 %v2007, %v2080
  %v2082 = vpop.f32.mrb[0].mxu0
  %2083 = vmatprep.mubr.f32.mxu0 0.0
  %2084 = vmatmul.mubr.f32.gmra.mrb[0].mxu0 %v2012
  %v2085 = vpop.f32.mrb[0].mxu0
  %v2086 = vadd.f32 %v2007, %v2085
  %v2087 = vpop.f32.mrb[0].mxu0
  %2088 = vdwg.mxu0
  %2089 = vst [vmem:[%s3] sm:$0xff] %v2081
  %2090 = vst [vmem:[%s3 + $0x8] sm:$0xff] %v2086
  // Predicated region
  $region14: #{show_and_tell_forward.1} parent=0 // pred_check
    _
  $region15: #{show_and_tell_forward.1} parent=0 // pred_check_branch
    %2092 = sbr.rel (0) target = $region17
  $region16: #{show_and_tell_forward.1} parent=0 // pred_region
    _
  $region17: #{show_and_tell_forward.1} parent=0 // pred_fallthru
    _
  // Predicated region
  $region18: #{show_and_tell_forward.1} parent=0 // pred_check
    _
  $region19: #{show_and_tell_forward.1} parent=0 // pred_check_branch
    %2094 = sbr.rel (0) target = $region21
  $region20: #{show_and_tell_forward.1} parent=0 // pred_region
    _
  $region21: #{show_and_tell_forward.1} parent=0 // pred_fallthru
    _

</llo_original>
